<compile_context>
chip_gen: v5e
topology: v5e:2x2
jax: 0.10.0
libtpu: 0.0.40
codegen_flags: <defaults>
</compile_context>

<pallas_src>
import jax
import jax.numpy as jnp
from jax.experimental import pallas as pl
from jax.experimental.pallas import tpu as pltpu


# ----------------------------- Pallas kernel ------------------------------- #

def _make_fused_lstm_kernel(num_layers, B, S, H):
    """Builds the fused kernel body for a fixed (static) model configuration.

    Ref layout (after x_ref):
      [w_ih_0 (D,4H), w_hh_0 (H,4H), b_0 (1,4H),
       w_cat_1 (2H,4H), b_1 (1,4H), ..., w_cat_{L-1}, b_{L-1},
       lin_w (H,O), lin_b (1,O), out_ref (B,O)]
    Gate columns are pre-permuted to (i, f, o, g).
    """

    def kernel(x_ref, *refs):
        out_ref = refs[-1]
        lin_w = refs[-3][...]                       # (H, O)
        lin_b = refs[-2][...]                       # (1, O)

        w_ih0 = refs[0][...]                        # (D, 4H)
        w_hh0 = refs[1][...]                        # (H, 4H)
        b0 = refs[2][...]                           # (1, 4H)
        # Fused (input|recurrent) weights for layers > 0, loaded once.
        w_cat = [None] + [refs[3 + 2 * (l - 1)][...] for l in range(1, num_layers)]
        b_lay = [None] + [refs[4 + 2 * (l - 1)][...] for l in range(1, num_layers)]

        x = x_ref[...]                              # (S*B, D) time-major f32

        # Hoisted layer-0 input projection for every time step (one MXU pass).
        # TODO(synk): cast dot operands to bf16 at scaled configs (H >= 128);
        #             kept f32 here to match the f32 reference at 1e-5.
        gx0 = jnp.dot(x, w_ih0, preferred_element_type=jnp.float32) + b0  # (S*B, 4H)

        # Sigmoid on the (i,f,o) lanes, tanh on the g lanes, blended over the
        # whole (B,4H) vreg with a single lane-index select — no lane-subrange
        # extracts in front of the EUP on the serial path.
        lane = jax.lax.broadcasted_iota(jnp.int32, (B, 4 * H), 1)
        sig_lanes = lane < 3 * H

        def gate_step(gates, c):
            act = jnp.where(sig_lanes, jax.nn.sigmoid(gates), jnp.tanh(gates))
            i_g = act[:, 0 * H:1 * H]
            f_g = act[:, 1 * H:2 * H]
            o_g = act[:, 2 * H:3 * H]
            g_g = act[:, 3 * H:4 * H]
            c = f_g * c + i_g * g_g
            return o_g * jnp.tanh(c), c

        zeros = jnp.zeros((B, H), jnp.float32)
        h = [zeros] * num_layers
        c = [zeros] * num_layers

        # (layer, time) wavefront: wave w runs layer l at step t = w - l, so
        # the critical path is S + L - 1 waves instead of S * L steps.  Layers
        # are processed in DECREASING order inside a wave so layer l reads
        # layer l-1's output from the previous wave (not yet overwritten).
        for w in range(S + num_layers - 1):
            for l in range(num_layers - 1, -1, -1):
                t = w - l
                if not 0 <= t < S:
                    continue
                if l == 0:
                    gates = gx0[t * B:(t + 1) * B, :] + jnp.dot(
                        h[0], w_hh0, preferred_element_type=jnp.float32)
                else:
                    hin = jnp.concatenate([h[l - 1], h[l]], axis=1)   # (B, 2H)
                    gates = jnp.dot(
                        hin, w_cat[l], preferred_element_type=jnp.float32
                    ) + b_lay[l]
                h[l], c[l] = gate_step(gates, c[l])

        # Fused output head on ht[-1] (last layer, last step).
        # TODO(synk): O=4 output is lane-sparse; pad O to a multiple of 128 if
        #             the head ever grows.
        out_ref[...] = (
            jnp.dot(h[num_layers - 1], lin_w, preferred_element_type=jnp.float32)
            + lin_b
        ).astype(out_ref.dtype)

    return kernel


def _full_block(shape):
    nd = len(shape)
    return pl.BlockSpec(shape, lambda nd=nd: (0,) * nd)


# ------------------------------- wrapper ------------------------------------ #

@jax.jit
def lstm_model_forward(token_ids, params):
    """Embedding gather (plain JAX) -> fused Pallas kernel (LSTM stack + head)."""
    # Embedding lookup — data-dependent HBM gather, kept as glue in plain JAX.
    x = params["embedding"][token_ids]                   # (B, S, D) f32
    # Dropout(p=0.2) is identity at inference (PyTorch eval semantics).
    B, S, D = x.shape
    H = params["lstm_layers"][0]["w_hh_t"].shape[0]
    O = params["lin_w_t"].shape[1]
    num_layers = len(params["lstm_layers"])

    # Pad batch up to a multiple of 8 so (B, ·) operands fill vreg sublanes;
    # padded rows are discarded after the kernel.
    B_pad = max(8, -(-B // 8) * 8)
    if B_pad != B:
        x = jnp.pad(x, ((0, B_pad - B), (0, 0), (0, 0)))

    # Wrapper-side time-major flatten (row r = t*B_pad + b): layout plumbing
    # done by XLA outside the kernel.
    x_tm = jnp.transpose(x, (1, 0, 2)).reshape(S * B_pad, D)

    args = [x_tm]
    in_specs = [_full_block((S * B_pad, D))]

    l0 = params["lstm_layers"][0]
    for w in (l0["w_ih_t"], l0["w_hh_t"], l0["b"]):
        args.append(w)
        in_specs.append(_full_block(w.shape))
    for layer in params["lstm_layers"][1:]:
        w_cat = jnp.concatenate([layer["w_ih_t"], layer["w_hh_t"]], axis=0)  # (2H,4H)
        args.append(w_cat)
        in_specs.append(_full_block(w_cat.shape))
        args.append(layer["b"])
        in_specs.append(_full_block(layer["b"].shape))
    args.append(params["lin_w_t"])
    in_specs.append(_full_block(params["lin_w_t"].shape))
    args.append(params["lin_b"])
    in_specs.append(_full_block(params["lin_b"].shape))

    kernel = _make_fused_lstm_kernel(num_layers, B_pad, S, H)

    out = pl.pallas_call(
        kernel,
        out_shape=jax.ShapeDtypeStruct((B_pad, O), jnp.float32),
        grid=(),                                  # single invocation, fully fused
        in_specs=in_specs,
        out_specs=_full_block((B_pad, O)),
        compiler_params=pltpu.CompilerParams(vmem_limit_bytes=32 * 1024 * 1024),
    )(*args)
    return out[:B]


# ---------------------------- parameter init -------------------------------- #

def _pt_to_ifog(w, H):
    """Permute PyTorch (i, f, g, o) gate blocks along axis 0 to (i, f, o, g)."""
    return jnp.concatenate([w[:2 * H], w[3 * H:4 * H], w[2 * H:3 * H]], axis=0)


def init_params(key, vocab, input_size, hidden_size, num_layers, output_size):
    keys = jax.random.split(key, 3 + 4 * num_layers)
    emb = jax.random.normal(keys[0], (vocab, input_size), jnp.float32)
    emb = emb.at[0].set(0.0)                    # padding_idx=0

    H = hidden_size
    bound = 1.0 / jnp.sqrt(hidden_size)
    layers = []
    for l in range(num_layers):
        d_in = input_size if l == 0 else hidden_size
        k = keys[3 + 4 * l: 3 + 4 * (l + 1)]
        # PyTorch layout: rows packed as (i, f, g, o).
        w_ih = jax.random.uniform(k[0], (4 * H, d_in), jnp.float32, -bound, bound)
        w_hh = jax.random.uniform(k[1], (4 * H, H), jnp.float32, -bound, bound)
        b_ih = jax.random.uniform(k[2], (4 * H,), jnp.float32, -bound, bound)
        b_hh = jax.random.uniform(k[3], (4 * H,), jnp.float32, -bound, bound)
        # Repack to (i, f, o, g) columns so the kernel uses contiguous slices.
        layers.append({
            "w_ih_t": _pt_to_ifog(w_ih, H).T,               # (D_in, 4H)
            "w_hh_t": _pt_to_ifog(w_hh, H).T,               # (H,    4H)
            "b": _pt_to_ifog(b_ih + b_hh, H)[None, :],      # (1,    4H)
        })

    lin_bound = 1.0 / jnp.sqrt(hidden_size)
    lin_w = jax.random.uniform(keys[1], (output_size, hidden_size), jnp.float32,
                               -lin_bound, lin_bound)
    lin_b = jax.random.uniform(keys[2], (output_size,), jnp.float32,
                               -lin_bound, lin_bound)

    return {
        "embedding": emb,
        "lstm_layers": layers,
        "lin_w_t": lin_w.T,                         # (H, O)
        "lin_b": lin_b[None, :],                    # (1, O)
    }


# -------------------------- pure-JAX reference ------------------------------ #

def reference_forward(token_ids, params):
    x = params["embedding"][token_ids]              # (B, S, D)
    B = x.shape[0]
    h_seq = jnp.transpose(x, (1, 0, 2))             # (S, B, D)
    for layer in params["lstm_layers"]:
        H = layer["w_hh_t"].shape[0]

        def step(carry, x_t, layer=layer, H=H):
            h, c = carry
            gates = x_t @ layer["w_ih_t"] + h @ layer["w_hh_t"] + layer["b"]
            i = jax.nn.sigmoid(gates[:, 0:H])
            f = jax.nn.sigmoid(gates[:, H:2 * H])
            o = jax.nn.sigmoid(gates[:, 2 * H:3 * H])
            g = jnp.tanh(gates[:, 3 * H:4 * H])
            c = f * c + i * g
            h = o * jnp.tanh(c)
            return (h, c), h

        init = (jnp.zeros((B, H), jnp.float32), jnp.zeros((B, H), jnp.float32))
        _, h_seq = jax.lax.scan(step, init, h_seq)
    return h_seq[-1] @ params["lin_w_t"] + params["lin_b"]


# --------------------------------- main ------------------------------------- #

if __name__ == "__main__":
    VOCAB = 5 * 10 ** 4
    INPUT_SIZE = 16
    HIDDEN_SIZE = 32
    NUM_LAYERS = 2
    OUTPUT_SIZE = 4
    BATCH = 2
    SEQ = 8

    key = jax.random.PRNGKey(0)
    k_param, k_tok = jax.random.split(key)

    params = init_params(k_param, VOCAB, INPUT_SIZE, HIDDEN_SIZE, NUM_LAYERS,
                         OUTPUT_SIZE)

    token_ids = jax.random.randint(k_tok, (BATCH, SEQ), 0, VOCAB, dtype=jnp.int32)
    token_ids = token_ids.at[:, -1].set(0)          # include some padding_idx tokens

    out = lstm_model_forward(token_ids, params)
    out = jax.block_until_ready(out)

    ref = jax.block_until_ready(reference_forward(token_ids, params))
    assert out.shape == (BATCH, OUTPUT_SIZE), out.shape
    assert jnp.allclose(out, ref, atol=1e-5, rtol=1e-5), (out, ref)

    print("KERNEL_OK")
</pallas_src>

<mosaic_0001>
module attributes {stable_mosaic.version = 11 : i64} {
  func.func @kernel(%arg0: memref<64x16xf32, #tpu.memory_space<vmem>>, %arg1: memref<16x128xf32, #tpu.memory_space<vmem>>, %arg2: memref<32x128xf32, #tpu.memory_space<vmem>>, %arg3: memref<1x128xf32, #tpu.memory_space<vmem>>, %arg4: memref<64x128xf32, #tpu.memory_space<vmem>>, %arg5: memref<1x128xf32, #tpu.memory_space<vmem>>, %arg6: memref<32x4xf32, #tpu.memory_space<vmem>>, %arg7: memref<1x4xf32, #tpu.memory_space<vmem>>, %arg8: memref<8x4xf32, #tpu.memory_space<vmem>>) attributes {dimension_semantics = [], scalar_prefetch = 0 : i64, scratch_operands = 0 : i64, tpu.core_type = #tpu.core_type<tc>} {
    %c0 = arith.constant 0 : index
    %c0_0 = arith.constant 0 : index
    %0 = vector.load %arg6[%c0, %c0_0] : memref<32x4xf32, #tpu.memory_space<vmem>>, vector<32x4xf32>
    %c0_1 = arith.constant 0 : index
    %c0_2 = arith.constant 0 : index
    %1 = vector.load %arg7[%c0_1, %c0_2] : memref<1x4xf32, #tpu.memory_space<vmem>>, vector<1x4xf32>
    %c0_3 = arith.constant 0 : index
    %c0_4 = arith.constant 0 : index
    %2 = vector.load %arg1[%c0_3, %c0_4] : memref<16x128xf32, #tpu.memory_space<vmem>>, vector<16x128xf32>
    %c0_5 = arith.constant 0 : index
    %c0_6 = arith.constant 0 : index
    %3 = vector.load %arg2[%c0_5, %c0_6] : memref<32x128xf32, #tpu.memory_space<vmem>>, vector<32x128xf32>
    %c0_7 = arith.constant 0 : index
    %c0_8 = arith.constant 0 : index
    %4 = vector.load %arg3[%c0_7, %c0_8] : memref<1x128xf32, #tpu.memory_space<vmem>>, vector<1x128xf32>
    %c0_9 = arith.constant 0 : index
    %c0_10 = arith.constant 0 : index
    %5 = vector.load %arg4[%c0_9, %c0_10] : memref<64x128xf32, #tpu.memory_space<vmem>>, vector<64x128xf32>
    %c0_11 = arith.constant 0 : index
    %c0_12 = arith.constant 0 : index
    %6 = vector.load %arg5[%c0_11, %c0_12] : memref<1x128xf32, #tpu.memory_space<vmem>>, vector<1x128xf32>
    %c0_13 = arith.constant 0 : index
    %c0_14 = arith.constant 0 : index
    %7 = vector.load %arg0[%c0_13, %c0_14] : memref<64x16xf32, #tpu.memory_space<vmem>>, vector<64x16xf32>
    %cst = arith.constant dense<0.000000e+00> : vector<64x128xf32>
    %8 = tpu.matmul %7, %2, %cst {dimension_numbers = #tpu.dot_dimension_numbers<[1], [0], [0], [1], [0, 0, 1, 1], [], []>} : vector<64x16xf32>, vector<16x128xf32>, vector<64x128xf32> -> vector<64x128xf32>
    %9 = vector.broadcast %4 : vector<1x128xf32> to vector<64x128xf32>
    %10 = arith.addf %8, %9 : vector<64x128xf32>
    %11 = tpu.iota {dimensions = array<i32: 1>} : vector<8x128xi32>
    %c96_i32 = arith.constant 96 : i32
    %12 = vector.broadcast %c96_i32 : i32 to vector<8x128xi32>
    %13 = arith.cmpi slt, %11, %12 : vector<8x128xi32>
    %cst_15 = arith.constant 0.000000e+00 : f32
    %14 = vector.broadcast %cst_15 : f32 to vector<8x32xf32>
    %15 = vector.extract_strided_slice %10 {offsets = [0, 0], sizes = [8, 128], strides = [1, 1]} : vector<64x128xf32> to vector<8x128xf32>
    %cst_16 = arith.constant dense<0.000000e+00> : vector<8x128xf32>
    %16 = tpu.matmul %14, %3, %cst_16 {dimension_numbers = #tpu.dot_dimension_numbers<[1], [0], [0], [1], [0, 0, 1, 1], [], []>} : vector<8x32xf32>, vector<32x128xf32>, vector<8x128xf32> -> vector<8x128xf32>
    %17 = arith.addf %15, %16 : vector<8x128xf32>
    %18 = arith.negf %17 : vector<8x128xf32>
    %19 = math.exp %18 : vector<8x128xf32>
    %cst_17 = arith.constant 1.000000e+00 : f32
    %20 = vector.broadcast %cst_17 : f32 to vector<8x128xf32>
    %21 = arith.addf %20, %19 : vector<8x128xf32>
    %22 = arith.divf %20, %21 : vector<8x128xf32>
    %23 = math.tanh %17 : vector<8x128xf32>
    %24 = arith.select %13, %22, %23 : vector<8x128xi1>, vector<8x128xf32>
    %25 = vector.extract_strided_slice %24 {offsets = [0, 0], sizes = [8, 32], strides = [1, 1]} : vector<8x128xf32> to vector<8x32xf32>
    %26 = vector.extract_strided_slice %24 {offsets = [0, 32], sizes = [8, 32], strides = [1, 1]} : vector<8x128xf32> to vector<8x32xf32>
    %27 = vector.extract_strided_slice %24 {offsets = [0, 64], sizes = [8, 32], strides = [1, 1]} : vector<8x128xf32> to vector<8x32xf32>
    %28 = vector.extract_strided_slice %24 {offsets = [0, 96], sizes = [8, 32], strides = [1, 1]} : vector<8x128xf32> to vector<8x32xf32>
    %29 = arith.mulf %26, %14 : vector<8x32xf32>
    %30 = arith.mulf %25, %28 : vector<8x32xf32>
    %31 = arith.addf %29, %30 : vector<8x32xf32>
    %32 = math.tanh %31 : vector<8x32xf32>
    %33 = arith.mulf %27, %32 : vector<8x32xf32>
    %34 = tpu.concatenate %33, %14 in 1 : vector<8x32xf32>, vector<8x32xf32> -> vector<8x64xf32>
    %cst_18 = arith.constant dense<0.000000e+00> : vector<8x128xf32>
    %35 = tpu.matmul %34, %5, %cst_18 {dimension_numbers = #tpu.dot_dimension_numbers<[1], [0], [0], [1], [0, 0, 1, 1], [], []>} : vector<8x64xf32>, vector<64x128xf32>, vector<8x128xf32> -> vector<8x128xf32>
    %36 = vector.broadcast %6 : vector<1x128xf32> to vector<8x128xf32>
    %37 = arith.addf %35, %36 : vector<8x128xf32>
    %38 = arith.negf %37 : vector<8x128xf32>
    %39 = math.exp %38 : vector<8x128xf32>
    %cst_19 = arith.constant 1.000000e+00 : f32
    %40 = vector.broadcast %cst_19 : f32 to vector<8x128xf32>
    %41 = arith.addf %40, %39 : vector<8x128xf32>
    %42 = arith.divf %40, %41 : vector<8x128xf32>
    %43 = math.tanh %37 : vector<8x128xf32>
    %44 = arith.select %13, %42, %43 : vector<8x128xi1>, vector<8x128xf32>
    %45 = vector.extract_strided_slice %44 {offsets = [0, 0], sizes = [8, 32], strides = [1, 1]} : vector<8x128xf32> to vector<8x32xf32>
    %46 = vector.extract_strided_slice %44 {offsets = [0, 32], sizes = [8, 32], strides = [1, 1]} : vector<8x128xf32> to vector<8x32xf32>
    %47 = vector.extract_strided_slice %44 {offsets = [0, 64], sizes = [8, 32], strides = [1, 1]} : vector<8x128xf32> to vector<8x32xf32>
    %48 = vector.extract_strided_slice %44 {offsets = [0, 96], sizes = [8, 32], strides = [1, 1]} : vector<8x128xf32> to vector<8x32xf32>
    %49 = arith.mulf %46, %14 : vector<8x32xf32>
    %50 = arith.mulf %45, %48 : vector<8x32xf32>
    %51 = arith.addf %49, %50 : vector<8x32xf32>
    %52 = math.tanh %51 : vector<8x32xf32>
    %53 = arith.mulf %47, %52 : vector<8x32xf32>
    %54 = vector.extract_strided_slice %10 {offsets = [8, 0], sizes = [8, 128], strides = [1, 1]} : vector<64x128xf32> to vector<8x128xf32>
    %cst_20 = arith.constant dense<0.000000e+00> : vector<8x128xf32>
    %55 = tpu.matmul %33, %3, %cst_20 {dimension_numbers = #tpu.dot_dimension_numbers<[1], [0], [0], [1], [0, 0, 1, 1], [], []>} : vector<8x32xf32>, vector<32x128xf32>, vector<8x128xf32> -> vector<8x128xf32>
    %56 = arith.addf %54, %55 : vector<8x128xf32>
    %57 = arith.negf %56 : vector<8x128xf32>
    %58 = math.exp %57 : vector<8x128xf32>
    %cst_21 = arith.constant 1.000000e+00 : f32
    %59 = vector.broadcast %cst_21 : f32 to vector<8x128xf32>
    %60 = arith.addf %59, %58 : vector<8x128xf32>
    %61 = arith.divf %59, %60 : vector<8x128xf32>
    %62 = math.tanh %56 : vector<8x128xf32>
    %63 = arith.select %13, %61, %62 : vector<8x128xi1>, vector<8x128xf32>
    %64 = vector.extract_strided_slice %63 {offsets = [0, 0], sizes = [8, 32], strides = [1, 1]} : vector<8x128xf32> to vector<8x32xf32>
    %65 = vector.extract_strided_slice %63 {offsets = [0, 32], sizes = [8, 32], strides = [1, 1]} : vector<8x128xf32> to vector<8x32xf32>
    %66 = vector.extract_strided_slice %63 {offsets = [0, 64], sizes = [8, 32], strides = [1, 1]} : vector<8x128xf32> to vector<8x32xf32>
    %67 = vector.extract_strided_slice %63 {offsets = [0, 96], sizes = [8, 32], strides = [1, 1]} : vector<8x128xf32> to vector<8x32xf32>
    %68 = arith.mulf %65, %31 : vector<8x32xf32>
    %69 = arith.mulf %64, %67 : vector<8x32xf32>
    %70 = arith.addf %68, %69 : vector<8x32xf32>
    %71 = math.tanh %70 : vector<8x32xf32>
    %72 = arith.mulf %66, %71 : vector<8x32xf32>
    %73 = tpu.concatenate %72, %53 in 1 : vector<8x32xf32>, vector<8x32xf32> -> vector<8x64xf32>
    %cst_22 = arith.constant dense<0.000000e+00> : vector<8x128xf32>
    %74 = tpu.matmul %73, %5, %cst_22 {dimension_numbers = #tpu.dot_dimension_numbers<[1], [0], [0], [1], [0, 0, 1, 1], [], []>} : vector<8x64xf32>, vector<64x128xf32>, vector<8x128xf32> -> vector<8x128xf32>
    %75 = vector.broadcast %6 : vector<1x128xf32> to vector<8x128xf32>
    %76 = arith.addf %74, %75 : vector<8x128xf32>
    %77 = arith.negf %76 : vector<8x128xf32>
    %78 = math.exp %77 : vector<8x128xf32>
    %cst_23 = arith.constant 1.000000e+00 : f32
    %79 = vector.broadcast %cst_23 : f32 to vector<8x128xf32>
    %80 = arith.addf %79, %78 : vector<8x128xf32>
    %81 = arith.divf %79, %80 : vector<8x128xf32>
    %82 = math.tanh %76 : vector<8x128xf32>
    %83 = arith.select %13, %81, %82 : vector<8x128xi1>, vector<8x128xf32>
    %84 = vector.extract_strided_slice %83 {offsets = [0, 0], sizes = [8, 32], strides = [1, 1]} : vector<8x128xf32> to vector<8x32xf32>
    %85 = vector.extract_strided_slice %83 {offsets = [0, 32], sizes = [8, 32], strides = [1, 1]} : vector<8x128xf32> to vector<8x32xf32>
    %86 = vector.extract_strided_slice %83 {offsets = [0, 64], sizes = [8, 32], strides = [1, 1]} : vector<8x128xf32> to vector<8x32xf32>
    %87 = vector.extract_strided_slice %83 {offsets = [0, 96], sizes = [8, 32], strides = [1, 1]} : vector<8x128xf32> to vector<8x32xf32>
    %88 = arith.mulf %85, %51 : vector<8x32xf32>
    %89 = arith.mulf %84, %87 : vector<8x32xf32>
    %90 = arith.addf %88, %89 : vector<8x32xf32>
    %91 = math.tanh %90 : vector<8x32xf32>
    %92 = arith.mulf %86, %91 : vector<8x32xf32>
    %93 = vector.extract_strided_slice %10 {offsets = [16, 0], sizes = [8, 128], strides = [1, 1]} : vector<64x128xf32> to vector<8x128xf32>
    %cst_24 = arith.constant dense<0.000000e+00> : vector<8x128xf32>
    %94 = tpu.matmul %72, %3, %cst_24 {dimension_numbers = #tpu.dot_dimension_numbers<[1], [0], [0], [1], [0, 0, 1, 1], [], []>} : vector<8x32xf32>, vector<32x128xf32>, vector<8x128xf32> -> vector<8x128xf32>
    %95 = arith.addf %93, %94 : vector<8x128xf32>
    %96 = arith.negf %95 : vector<8x128xf32>
    %97 = math.exp %96 : vector<8x128xf32>
    %cst_25 = arith.constant 1.000000e+00 : f32
    %98 = vector.broadcast %cst_25 : f32 to vector<8x128xf32>
    %99 = arith.addf %98, %97 : vector<8x128xf32>
    %100 = arith.divf %98, %99 : vector<8x128xf32>
    %101 = math.tanh %95 : vector<8x128xf32>
    %102 = arith.select %13, %100, %101 : vector<8x128xi1>, vector<8x128xf32>
    %103 = vector.extract_strided_slice %102 {offsets = [0, 0], sizes = [8, 32], strides = [1, 1]} : vector<8x128xf32> to vector<8x32xf32>
    %104 = vector.extract_strided_slice %102 {offsets = [0, 32], sizes = [8, 32], strides = [1, 1]} : vector<8x128xf32> to vector<8x32xf32>
    %105 = vector.extract_strided_slice %102 {offsets = [0, 64], sizes = [8, 32], strides = [1, 1]} : vector<8x128xf32> to vector<8x32xf32>
    %106 = vector.extract_strided_slice %102 {offsets = [0, 96], sizes = [8, 32], strides = [1, 1]} : vector<8x128xf32> to vector<8x32xf32>
    %107 = arith.mulf %104, %70 : vector<8x32xf32>
    %108 = arith.mulf %103, %106 : vector<8x32xf32>
    %109 = arith.addf %107, %108 : vector<8x32xf32>
    %110 = math.tanh %109 : vector<8x32xf32>
    %111 = arith.mulf %105, %110 : vector<8x32xf32>
    %112 = tpu.concatenate %111, %92 in 1 : vector<8x32xf32>, vector<8x32xf32> -> vector<8x64xf32>
    %cst_26 = arith.constant dense<0.000000e+00> : vector<8x128xf32>
    %113 = tpu.matmul %112, %5, %cst_26 {dimension_numbers = #tpu.dot_dimension_numbers<[1], [0], [0], [1], [0, 0, 1, 1], [], []>} : vector<8x64xf32>, vector<64x128xf32>, vector<8x128xf32> -> vector<8x128xf32>
    %114 = vector.broadcast %6 : vector<1x128xf32> to vector<8x128xf32>
    %115 = arith.addf %113, %114 : vector<8x128xf32>
    %116 = arith.negf %115 : vector<8x128xf32>
    %117 = math.exp %116 : vector<8x128xf32>
    %cst_27 = arith.constant 1.000000e+00 : f32
    %118 = vector.broadcast %cst_27 : f32 to vector<8x128xf32>
    %119 = arith.addf %118, %117 : vector<8x128xf32>
    %120 = arith.divf %118, %119 : vector<8x128xf32>
    %121 = math.tanh %115 : vector<8x128xf32>
    %122 = arith.select %13, %120, %121 : vector<8x128xi1>, vector<8x128xf32>
    %123 = vector.extract_strided_slice %122 {offsets = [0, 0], sizes = [8, 32], strides = [1, 1]} : vector<8x128xf32> to vector<8x32xf32>
    %124 = vector.extract_strided_slice %122 {offsets = [0, 32], sizes = [8, 32], strides = [1, 1]} : vector<8x128xf32> to vector<8x32xf32>
    %125 = vector.extract_strided_slice %122 {offsets = [0, 64], sizes = [8, 32], strides = [1, 1]} : vector<8x128xf32> to vector<8x32xf32>
    %126 = vector.extract_strided_slice %122 {offsets = [0, 96], sizes = [8, 32], strides = [1, 1]} : vector<8x128xf32> to vector<8x32xf32>
    %127 = arith.mulf %124, %90 : vector<8x32xf32>
    %128 = arith.mulf %123, %126 : vector<8x32xf32>
    %129 = arith.addf %127, %128 : vector<8x32xf32>
    %130 = math.tanh %129 : vector<8x32xf32>
    %131 = arith.mulf %125, %130 : vector<8x32xf32>
    %132 = vector.extract_strided_slice %10 {offsets = [24, 0], sizes = [8, 128], strides = [1, 1]} : vector<64x128xf32> to vector<8x128xf32>
    %cst_28 = arith.constant dense<0.000000e+00> : vector<8x128xf32>
    %133 = tpu.matmul %111, %3, %cst_28 {dimension_numbers = #tpu.dot_dimension_numbers<[1], [0], [0], [1], [0, 0, 1, 1], [], []>} : vector<8x32xf32>, vector<32x128xf32>, vector<8x128xf32> -> vector<8x128xf32>
    %134 = arith.addf %132, %133 : vector<8x128xf32>
    %135 = arith.negf %134 : vector<8x128xf32>
    %136 = math.exp %135 : vector<8x128xf32>
    %cst_29 = arith.constant 1.000000e+00 : f32
    %137 = vector.broadcast %cst_29 : f32 to vector<8x128xf32>
    %138 = arith.addf %137, %136 : vector<8x128xf32>
    %139 = arith.divf %137, %138 : vector<8x128xf32>
    %140 = math.tanh %134 : vector<8x128xf32>
    %141 = arith.select %13, %139, %140 : vector<8x128xi1>, vector<8x128xf32>
    %142 = vector.extract_strided_slice %141 {offsets = [0, 0], sizes = [8, 32], strides = [1, 1]} : vector<8x128xf32> to vector<8x32xf32>
    %143 = vector.extract_strided_slice %141 {offsets = [0, 32], sizes = [8, 32], strides = [1, 1]} : vector<8x128xf32> to vector<8x32xf32>
    %144 = vector.extract_strided_slice %141 {offsets = [0, 64], sizes = [8, 32], strides = [1, 1]} : vector<8x128xf32> to vector<8x32xf32>
    %145 = vector.extract_strided_slice %141 {offsets = [0, 96], sizes = [8, 32], strides = [1, 1]} : vector<8x128xf32> to vector<8x32xf32>
    %146 = arith.mulf %143, %109 : vector<8x32xf32>
    %147 = arith.mulf %142, %145 : vector<8x32xf32>
    %148 = arith.addf %146, %147 : vector<8x32xf32>
    %149 = math.tanh %148 : vector<8x32xf32>
    %150 = arith.mulf %144, %149 : vector<8x32xf32>
    %151 = tpu.concatenate %150, %131 in 1 : vector<8x32xf32>, vector<8x32xf32> -> vector<8x64xf32>
    %cst_30 = arith.constant dense<0.000000e+00> : vector<8x128xf32>
    %152 = tpu.matmul %151, %5, %cst_30 {dimension_numbers = #tpu.dot_dimension_numbers<[1], [0], [0], [1], [0, 0, 1, 1], [], []>} : vector<8x64xf32>, vector<64x128xf32>, vector<8x128xf32> -> vector<8x128xf32>
    %153 = vector.broadcast %6 : vector<1x128xf32> to vector<8x128xf32>
    %154 = arith.addf %152, %153 : vector<8x128xf32>
    %155 = arith.negf %154 : vector<8x128xf32>
    %156 = math.exp %155 : vector<8x128xf32>
    %cst_31 = arith.constant 1.000000e+00 : f32
    %157 = vector.broadcast %cst_31 : f32 to vector<8x128xf32>
    %158 = arith.addf %157, %156 : vector<8x128xf32>
    %159 = arith.divf %157, %158 : vector<8x128xf32>
    %160 = math.tanh %154 : vector<8x128xf32>
    %161 = arith.select %13, %159, %160 : vector<8x128xi1>, vector<8x128xf32>
    %162 = vector.extract_strided_slice %161 {offsets = [0, 0], sizes = [8, 32], strides = [1, 1]} : vector<8x128xf32> to vector<8x32xf32>
    %163 = vector.extract_strided_slice %161 {offsets = [0, 32], sizes = [8, 32], strides = [1, 1]} : vector<8x128xf32> to vector<8x32xf32>
    %164 = vector.extract_strided_slice %161 {offsets = [0, 64], sizes = [8, 32], strides = [1, 1]} : vector<8x128xf32> to vector<8x32xf32>
    %165 = vector.extract_strided_slice %161 {offsets = [0, 96], sizes = [8, 32], strides = [1, 1]} : vector<8x128xf32> to vector<8x32xf32>
    %166 = arith.mulf %163, %129 : vector<8x32xf32>
    %167 = arith.mulf %162, %165 : vector<8x32xf32>
    %168 = arith.addf %166, %167 : vector<8x32xf32>
    %169 = math.tanh %168 : vector<8x32xf32>
    %170 = arith.mulf %164, %169 : vector<8x32xf32>
    %171 = vector.extract_strided_slice %10 {offsets = [32, 0], sizes = [8, 128], strides = [1, 1]} : vector<64x128xf32> to vector<8x128xf32>
    %cst_32 = arith.constant dense<0.000000e+00> : vector<8x128xf32>
    %172 = tpu.matmul %150, %3, %cst_32 {dimension_numbers = #tpu.dot_dimension_numbers<[1], [0], [0], [1], [0, 0, 1, 1], [], []>} : vector<8x32xf32>, vector<32x128xf32>, vector<8x128xf32> -> vector<8x128xf32>
    %173 = arith.addf %171, %172 : vector<8x128xf32>
    %174 = arith.negf %173 : vector<8x128xf32>
    %175 = math.exp %174 : vector<8x128xf32>
    %cst_33 = arith.constant 1.000000e+00 : f32
    %176 = vector.broadcast %cst_33 : f32 to vector<8x128xf32>
    %177 = arith.addf %176, %175 : vector<8x128xf32>
    %178 = arith.divf %176, %177 : vector<8x128xf32>
    %179 = math.tanh %173 : vector<8x128xf32>
    %180 = arith.select %13, %178, %179 : vector<8x128xi1>, vector<8x128xf32>
    %181 = vector.extract_strided_slice %180 {offsets = [0, 0], sizes = [8, 32], strides = [1, 1]} : vector<8x128xf32> to vector<8x32xf32>
    %182 = vector.extract_strided_slice %180 {offsets = [0, 32], sizes = [8, 32], strides = [1, 1]} : vector<8x128xf32> to vector<8x32xf32>
    %183 = vector.extract_strided_slice %180 {offsets = [0, 64], sizes = [8, 32], strides = [1, 1]} : vector<8x128xf32> to vector<8x32xf32>
    %184 = vector.extract_strided_slice %180 {offsets = [0, 96], sizes = [8, 32], strides = [1, 1]} : vector<8x128xf32> to vector<8x32xf32>
    %185 = arith.mulf %182, %148 : vector<8x32xf32>
    %186 = arith.mulf %181, %184 : vector<8x32xf32>
    %187 = arith.addf %185, %186 : vector<8x32xf32>
    %188 = math.tanh %187 : vector<8x32xf32>
    %189 = arith.mulf %183, %188 : vector<8x32xf32>
    %190 = tpu.concatenate %189, %170 in 1 : vector<8x32xf32>, vector<8x32xf32> -> vector<8x64xf32>
    %cst_34 = arith.constant dense<0.000000e+00> : vector<8x128xf32>
    %191 = tpu.matmul %190, %5, %cst_34 {dimension_numbers = #tpu.dot_dimension_numbers<[1], [0], [0], [1], [0, 0, 1, 1], [], []>} : vector<8x64xf32>, vector<64x128xf32>, vector<8x128xf32> -> vector<8x128xf32>
    %192 = vector.broadcast %6 : vector<1x128xf32> to vector<8x128xf32>
    %193 = arith.addf %191, %192 : vector<8x128xf32>
    %194 = arith.negf %193 : vector<8x128xf32>
    %195 = math.exp %194 : vector<8x128xf32>
    %cst_35 = arith.constant 1.000000e+00 : f32
    %196 = vector.broadcast %cst_35 : f32 to vector<8x128xf32>
    %197 = arith.addf %196, %195 : vector<8x128xf32>
    %198 = arith.divf %196, %197 : vector<8x128xf32>
    %199 = math.tanh %193 : vector<8x128xf32>
    %200 = arith.select %13, %198, %199 : vector<8x128xi1>, vector<8x128xf32>
    %201 = vector.extract_strided_slice %200 {offsets = [0, 0], sizes = [8, 32], strides = [1, 1]} : vector<8x128xf32> to vector<8x32xf32>
    %202 = vector.extract_strided_slice %200 {offsets = [0, 32], sizes = [8, 32], strides = [1, 1]} : vector<8x128xf32> to vector<8x32xf32>
    %203 = vector.extract_strided_slice %200 {offsets = [0, 64], sizes = [8, 32], strides = [1, 1]} : vector<8x128xf32> to vector<8x32xf32>
    %204 = vector.extract_strided_slice %200 {offsets = [0, 96], sizes = [8, 32], strides = [1, 1]} : vector<8x128xf32> to vector<8x32xf32>
    %205 = arith.mulf %202, %168 : vector<8x32xf32>
    %206 = arith.mulf %201, %204 : vector<8x32xf32>
    %207 = arith.addf %205, %206 : vector<8x32xf32>
    %208 = math.tanh %207 : vector<8x32xf32>
    %209 = arith.mulf %203, %208 : vector<8x32xf32>
    %210 = vector.extract_strided_slice %10 {offsets = [40, 0], sizes = [8, 128], strides = [1, 1]} : vector<64x128xf32> to vector<8x128xf32>
    %cst_36 = arith.constant dense<0.000000e+00> : vector<8x128xf32>
    %211 = tpu.matmul %189, %3, %cst_36 {dimension_numbers = #tpu.dot_dimension_numbers<[1], [0], [0], [1], [0, 0, 1, 1], [], []>} : vector<8x32xf32>, vector<32x128xf32>, vector<8x128xf32> -> vector<8x128xf32>
    %212 = arith.addf %210, %211 : vector<8x128xf32>
    %213 = arith.negf %212 : vector<8x128xf32>
    %214 = math.exp %213 : vector<8x128xf32>
    %cst_37 = arith.constant 1.000000e+00 : f32
    %215 = vector.broadcast %cst_37 : f32 to vector<8x128xf32>
    %216 = arith.addf %215, %214 : vector<8x128xf32>
    %217 = arith.divf %215, %216 : vector<8x128xf32>
    %218 = math.tanh %212 : vector<8x128xf32>
    %219 = arith.select %13, %217, %218 : vector<8x128xi1>, vector<8x128xf32>
    %220 = vector.extract_strided_slice %219 {offsets = [0, 0], sizes = [8, 32], strides = [1, 1]} : vector<8x128xf32> to vector<8x32xf32>
    %221 = vector.extract_strided_slice %219 {offsets = [0, 32], sizes = [8, 32], strides = [1, 1]} : vector<8x128xf32> to vector<8x32xf32>
    %222 = vector.extract_strided_slice %219 {offsets = [0, 64], sizes = [8, 32], strides = [1, 1]} : vector<8x128xf32> to vector<8x32xf32>
    %223 = vector.extract_strided_slice %219 {offsets = [0, 96], sizes = [8, 32], strides = [1, 1]} : vector<8x128xf32> to vector<8x32xf32>
    %224 = arith.mulf %221, %187 : vector<8x32xf32>
    %225 = arith.mulf %220, %223 : vector<8x32xf32>
    %226 = arith.addf %224, %225 : vector<8x32xf32>
    %227 = math.tanh %226 : vector<8x32xf32>
    %228 = arith.mulf %222, %227 : vector<8x32xf32>
    %229 = tpu.concatenate %228, %209 in 1 : vector<8x32xf32>, vector<8x32xf32> -> vector<8x64xf32>
    %cst_38 = arith.constant dense<0.000000e+00> : vector<8x128xf32>
    %230 = tpu.matmul %229, %5, %cst_38 {dimension_numbers = #tpu.dot_dimension_numbers<[1], [0], [0], [1], [0, 0, 1, 1], [], []>} : vector<8x64xf32>, vector<64x128xf32>, vector<8x128xf32> -> vector<8x128xf32>
    %231 = vector.broadcast %6 : vector<1x128xf32> to vector<8x128xf32>
    %232 = arith.addf %230, %231 : vector<8x128xf32>
    %233 = arith.negf %232 : vector<8x128xf32>
    %234 = math.exp %233 : vector<8x128xf32>
    %cst_39 = arith.constant 1.000000e+00 : f32
    %235 = vector.broadcast %cst_39 : f32 to vector<8x128xf32>
    %236 = arith.addf %235, %234 : vector<8x128xf32>
    %237 = arith.divf %235, %236 : vector<8x128xf32>
    %238 = math.tanh %232 : vector<8x128xf32>
    %239 = arith.select %13, %237, %238 : vector<8x128xi1>, vector<8x128xf32>
    %240 = vector.extract_strided_slice %239 {offsets = [0, 0], sizes = [8, 32], strides = [1, 1]} : vector<8x128xf32> to vector<8x32xf32>
    %241 = vector.extract_strided_slice %239 {offsets = [0, 32], sizes = [8, 32], strides = [1, 1]} : vector<8x128xf32> to vector<8x32xf32>
    %242 = vector.extract_strided_slice %239 {offsets = [0, 64], sizes = [8, 32], strides = [1, 1]} : vector<8x128xf32> to vector<8x32xf32>
    %243 = vector.extract_strided_slice %239 {offsets = [0, 96], sizes = [8, 32], strides = [1, 1]} : vector<8x128xf32> to vector<8x32xf32>
    %244 = arith.mulf %241, %207 : vector<8x32xf32>
    %245 = arith.mulf %240, %243 : vector<8x32xf32>
    %246 = arith.addf %244, %245 : vector<8x32xf32>
    %247 = math.tanh %246 : vector<8x32xf32>
    %248 = arith.mulf %242, %247 : vector<8x32xf32>
    %249 = vector.extract_strided_slice %10 {offsets = [48, 0], sizes = [8, 128], strides = [1, 1]} : vector<64x128xf32> to vector<8x128xf32>
    %cst_40 = arith.constant dense<0.000000e+00> : vector<8x128xf32>
    %250 = tpu.matmul %228, %3, %cst_40 {dimension_numbers = #tpu.dot_dimension_numbers<[1], [0], [0], [1], [0, 0, 1, 1], [], []>} : vector<8x32xf32>, vector<32x128xf32>, vector<8x128xf32> -> vector<8x128xf32>
    %251 = arith.addf %249, %250 : vector<8x128xf32>
    %252 = arith.negf %251 : vector<8x128xf32>
    %253 = math.exp %252 : vector<8x128xf32>
    %cst_41 = arith.constant 1.000000e+00 : f32
    %254 = vector.broadcast %cst_41 : f32 to vector<8x128xf32>
    %255 = arith.addf %254, %253 : vector<8x128xf32>
    %256 = arith.divf %254, %255 : vector<8x128xf32>
    %257 = math.tanh %251 : vector<8x128xf32>
    %258 = arith.select %13, %256, %257 : vector<8x128xi1>, vector<8x128xf32>
    %259 = vector.extract_strided_slice %258 {offsets = [0, 0], sizes = [8, 32], strides = [1, 1]} : vector<8x128xf32> to vector<8x32xf32>
    %260 = vector.extract_strided_slice %258 {offsets = [0, 32], sizes = [8, 32], strides = [1, 1]} : vector<8x128xf32> to vector<8x32xf32>
    %261 = vector.extract_strided_slice %258 {offsets = [0, 64], sizes = [8, 32], strides = [1, 1]} : vector<8x128xf32> to vector<8x32xf32>
    %262 = vector.extract_strided_slice %258 {offsets = [0, 96], sizes = [8, 32], strides = [1, 1]} : vector<8x128xf32> to vector<8x32xf32>
    %263 = arith.mulf %260, %226 : vector<8x32xf32>
    %264 = arith.mulf %259, %262 : vector<8x32xf32>
    %265 = arith.addf %263, %264 : vector<8x32xf32>
    %266 = math.tanh %265 : vector<8x32xf32>
    %267 = arith.mulf %261, %266 : vector<8x32xf32>
    %268 = tpu.concatenate %267, %248 in 1 : vector<8x32xf32>, vector<8x32xf32> -> vector<8x64xf32>
    %cst_42 = arith.constant dense<0.000000e+00> : vector<8x128xf32>
    %269 = tpu.matmul %268, %5, %cst_42 {dimension_numbers = #tpu.dot_dimension_numbers<[1], [0], [0], [1], [0, 0, 1, 1], [], []>} : vector<8x64xf32>, vector<64x128xf32>, vector<8x128xf32> -> vector<8x128xf32>
    %270 = vector.broadcast %6 : vector<1x128xf32> to vector<8x128xf32>
    %271 = arith.addf %269, %270 : vector<8x128xf32>
    %272 = arith.negf %271 : vector<8x128xf32>
    %273 = math.exp %272 : vector<8x128xf32>
    %cst_43 = arith.constant 1.000000e+00 : f32
    %274 = vector.broadcast %cst_43 : f32 to vector<8x128xf32>
    %275 = arith.addf %274, %273 : vector<8x128xf32>
    %276 = arith.divf %274, %275 : vector<8x128xf32>
    %277 = math.tanh %271 : vector<8x128xf32>
    %278 = arith.select %13, %276, %277 : vector<8x128xi1>, vector<8x128xf32>
    %279 = vector.extract_strided_slice %278 {offsets = [0, 0], sizes = [8, 32], strides = [1, 1]} : vector<8x128xf32> to vector<8x32xf32>
    %280 = vector.extract_strided_slice %278 {offsets = [0, 32], sizes = [8, 32], strides = [1, 1]} : vector<8x128xf32> to vector<8x32xf32>
    %281 = vector.extract_strided_slice %278 {offsets = [0, 64], sizes = [8, 32], strides = [1, 1]} : vector<8x128xf32> to vector<8x32xf32>
    %282 = vector.extract_strided_slice %278 {offsets = [0, 96], sizes = [8, 32], strides = [1, 1]} : vector<8x128xf32> to vector<8x32xf32>
    %283 = arith.mulf %280, %246 : vector<8x32xf32>
    %284 = arith.mulf %279, %282 : vector<8x32xf32>
    %285 = arith.addf %283, %284 : vector<8x32xf32>
    %286 = math.tanh %285 : vector<8x32xf32>
    %287 = arith.mulf %281, %286 : vector<8x32xf32>
    %288 = vector.extract_strided_slice %10 {offsets = [56, 0], sizes = [8, 128], strides = [1, 1]} : vector<64x128xf32> to vector<8x128xf32>
    %cst_44 = arith.constant dense<0.000000e+00> : vector<8x128xf32>
    %289 = tpu.matmul %267, %3, %cst_44 {dimension_numbers = #tpu.dot_dimension_numbers<[1], [0], [0], [1], [0, 0, 1, 1], [], []>} : vector<8x32xf32>, vector<32x128xf32>, vector<8x128xf32> -> vector<8x128xf32>
    %290 = arith.addf %288, %289 : vector<8x128xf32>
    %291 = arith.negf %290 : vector<8x128xf32>
    %292 = math.exp %291 : vector<8x128xf32>
    %cst_45 = arith.constant 1.000000e+00 : f32
    %293 = vector.broadcast %cst_45 : f32 to vector<8x128xf32>
    %294 = arith.addf %293, %292 : vector<8x128xf32>
    %295 = arith.divf %293, %294 : vector<8x128xf32>
    %296 = math.tanh %290 : vector<8x128xf32>
    %297 = arith.select %13, %295, %296 : vector<8x128xi1>, vector<8x128xf32>
    %298 = vector.extract_strided_slice %297 {offsets = [0, 0], sizes = [8, 32], strides = [1, 1]} : vector<8x128xf32> to vector<8x32xf32>
    %299 = vector.extract_strided_slice %297 {offsets = [0, 32], sizes = [8, 32], strides = [1, 1]} : vector<8x128xf32> to vector<8x32xf32>
    %300 = vector.extract_strided_slice %297 {offsets = [0, 64], sizes = [8, 32], strides = [1, 1]} : vector<8x128xf32> to vector<8x32xf32>
    %301 = vector.extract_strided_slice %297 {offsets = [0, 96], sizes = [8, 32], strides = [1, 1]} : vector<8x128xf32> to vector<8x32xf32>
    %302 = arith.mulf %299, %265 : vector<8x32xf32>
    %303 = arith.mulf %298, %301 : vector<8x32xf32>
    %304 = arith.addf %302, %303 : vector<8x32xf32>
    %305 = math.tanh %304 : vector<8x32xf32>
    %306 = arith.mulf %300, %305 : vector<8x32xf32>
    %307 = tpu.concatenate %306, %287 in 1 : vector<8x32xf32>, vector<8x32xf32> -> vector<8x64xf32>
    %cst_46 = arith.constant dense<0.000000e+00> : vector<8x128xf32>
    %308 = tpu.matmul %307, %5, %cst_46 {dimension_numbers = #tpu.dot_dimension_numbers<[1], [0], [0], [1], [0, 0, 1, 1], [], []>} : vector<8x64xf32>, vector<64x128xf32>, vector<8x128xf32> -> vector<8x128xf32>
    %309 = vector.broadcast %6 : vector<1x128xf32> to vector<8x128xf32>
    %310 = arith.addf %308, %309 : vector<8x128xf32>
    %311 = arith.negf %310 : vector<8x128xf32>
    %312 = math.exp %311 : vector<8x128xf32>
    %cst_47 = arith.constant 1.000000e+00 : f32
    %313 = vector.broadcast %cst_47 : f32 to vector<8x128xf32>
    %314 = arith.addf %313, %312 : vector<8x128xf32>
    %315 = arith.divf %313, %314 : vector<8x128xf32>
    %316 = math.tanh %310 : vector<8x128xf32>
    %317 = arith.select %13, %315, %316 : vector<8x128xi1>, vector<8x128xf32>
    %318 = vector.extract_strided_slice %317 {offsets = [0, 0], sizes = [8, 32], strides = [1, 1]} : vector<8x128xf32> to vector<8x32xf32>
    %319 = vector.extract_strided_slice %317 {offsets = [0, 32], sizes = [8, 32], strides = [1, 1]} : vector<8x128xf32> to vector<8x32xf32>
    %320 = vector.extract_strided_slice %317 {offsets = [0, 64], sizes = [8, 32], strides = [1, 1]} : vector<8x128xf32> to vector<8x32xf32>
    %321 = vector.extract_strided_slice %317 {offsets = [0, 96], sizes = [8, 32], strides = [1, 1]} : vector<8x128xf32> to vector<8x32xf32>
    %322 = arith.mulf %319, %285 : vector<8x32xf32>
    %323 = arith.mulf %318, %321 : vector<8x32xf32>
    %324 = arith.addf %322, %323 : vector<8x32xf32>
    %325 = math.tanh %324 : vector<8x32xf32>
    %326 = arith.mulf %320, %325 : vector<8x32xf32>
    %cst_48 = arith.constant dense<0.000000e+00> : vector<8x4xf32>
    %327 = tpu.matmul %326, %0, %cst_48 {dimension_numbers = #tpu.dot_dimension_numbers<[1], [0], [0], [1], [0, 0, 1, 1], [], []>} : vector<8x32xf32>, vector<32x4xf32>, vector<8x4xf32> -> vector<8x4xf32>
    %328 = vector.broadcast %1 : vector<1x4xf32> to vector<8x4xf32>
    %329 = arith.addf %327, %328 : vector<8x4xf32>
    %c0_49 = arith.constant 0 : index
    %c0_50 = arith.constant 0 : index
    %330 = vector.load %arg8[%c0_49, %c0_50] : memref<8x4xf32, #tpu.memory_space<vmem>>, vector<8x4xf32>
    tpu.vector_store %arg8[%c0_49, %c0_50], %329 {strides = array<i32>} : memref<8x4xf32, #tpu.memory_space<vmem>>, vector<8x4xf32>,
    return
  }
}

</mosaic_0001>

<llo_original>
// kernel: lstm_model_forward.1
$region0: #{lstm_model_forward.1}
  #allocation0 [shape = 'u32[]', space=smem, size = 0x4, offset = 0x4, fixed_abs, tag = 'smem constant byte address 0x4 - core index']
  #allocation1 [shape = 'u32[72,128]{1,0:T(1,128)}', space=vmem, size = 0x9000, scoped, tag = 'internal scratch']
  %s0 = inlined_call_operand.vmem [shape: f32[64,16], index: 0, kind: input, shape index: {}]
  %s1 = inlined_call_operand.vmem [shape: f32[16,128], index: 1, kind: input, shape index: {}]
  %s2 = inlined_call_operand.vmem [shape: f32[32,128], index: 2, kind: input, shape index: {}]
  %s3 = inlined_call_operand.vmem [shape: f32[1,128], index: 3, kind: input, shape index: {}]
  %s4 = inlined_call_operand.vmem [shape: f32[64,128], index: 4, kind: input, shape index: {}]
  %s5 = inlined_call_operand.vmem [shape: f32[1,128], index: 5, kind: input, shape index: {}]
  %s6 = inlined_call_operand.vmem [shape: f32[32,4], index: 6, kind: input, shape index: {}]
  %s7 = inlined_call_operand.vmem [shape: f32[1,4], index: 7, kind: input, shape index: {}]
  %s8 = inlined_call_operand.vmem [shape: f32[8,4], index: 8, kind: output, shape index: {}]
  %s9 = sld [smem:[#allocation0]]
  $region42: #{lstm_model_forward.1} parent=0
    _
  %s11 = ssub.s32 1, %s9
  %s12 = scalar_select 0, %s11, %s9
  // Predicated region
  $region2: #{lstm_model_forward.1} parent=0 // pred_check
    _
  $region3: #{lstm_model_forward.1} parent=0 // pred_check_branch
    %14 = sbr.rel (0) target = $region5
  $region4: #{lstm_model_forward.1} parent=0 // pred_region
    _
  $region5: #{lstm_model_forward.1} parent=0 // pred_fallthru
    _
  // Predicated region
  $region6: #{lstm_model_forward.1} parent=0 // pred_check
    _
  $region7: #{lstm_model_forward.1} parent=0 // pred_check_branch
    %16 = sbr.rel (0) target = $region9
  $region8: #{lstm_model_forward.1} parent=0 // pred_region
    _
  $region9: #{lstm_model_forward.1} parent=0 // pred_fallthru
    _
  // Predicated region
  $region10: #{lstm_model_forward.1} parent=0 // pred_check
    _
  $region11: #{lstm_model_forward.1} parent=0 // pred_check_branch
    %18 = sbr.rel (0) target = $region13
  $region12: #{lstm_model_forward.1} parent=0 // pred_region
    _
  $region13: #{lstm_model_forward.1} parent=0 // pred_fallthru
    _
  // Predicated region
  $region14: #{lstm_model_forward.1} parent=0 // pred_check
    _
  $region15: #{lstm_model_forward.1} parent=0 // pred_check_branch
    %20 = sbr.rel (0) target = $region17
  $region16: #{lstm_model_forward.1} parent=0 // pred_region
    _
  $region17: #{lstm_model_forward.1} parent=0 // pred_fallthru
    _
  // Predicated region
  $region18: #{lstm_model_forward.1} parent=0 // pred_check
    _
  $region19: #{lstm_model_forward.1} parent=0 // pred_check_branch
    %22 = sbr.rel (0) target = $region21
  $region20: #{lstm_model_forward.1} parent=0 // pred_region
    _
  $region21: #{lstm_model_forward.1} parent=0 // pred_fallthru
    _
  // Predicated region
  $region22: #{lstm_model_forward.1} parent=0 // pred_check
    _
  $region23: #{lstm_model_forward.1} parent=0 // pred_check_branch
    %24 = sbr.rel (0) target = $region25
  $region24: #{lstm_model_forward.1} parent=0 // pred_region
    _
  $region25: #{lstm_model_forward.1} parent=0 // pred_fallthru
    _
  // Predicated region
  $region26: #{lstm_model_forward.1} parent=0 // pred_check
    _
  $region27: #{lstm_model_forward.1} parent=0 // pred_check_branch
    %26 = sbr.rel (0) target = $region29
  $region28: #{lstm_model_forward.1} parent=0 // pred_region
    _
  $region29: #{lstm_model_forward.1} parent=0 // pred_fallthru
    _
  // Predicated region
  $region30: #{lstm_model_forward.1} parent=0 // pred_check
    _
  $region31: #{lstm_model_forward.1} parent=0 // pred_check_branch
    %28 = sbr.rel (0) target = $region33
  $region32: #{lstm_model_forward.1} parent=0 // pred_region
    _
  $region33: #{lstm_model_forward.1} parent=0 // pred_fallthru
    _
  %v29 = vld [vmem:[%s6] sm:$0xff]
  %v30 = vld [vmem:[%s6 + $0x8] sm:$0xff]
  %v31 = vld [vmem:[%s6 + $0x10] sm:$0xff]
  %v32 = vld [vmem:[%s6 + $0x18] sm:$0xff]
  %v33 = vld [vmem:[%s7] sm:$0x1]
  %v34 = vld [vmem:[%s1] sm:$0xff]
  %v35 = vld [vmem:[%s1 + $0x8] sm:$0xff]
  %v36 = vld [vmem:[%s2] sm:$0xff]
  %v37 = vld [vmem:[%s2 + $0x8] sm:$0xff]
  %v38 = vld [vmem:[%s2 + $0x10] sm:$0xff]
  %v39 = vld [vmem:[%s2 + $0x18] sm:$0xff]
  %v40 = vld [vmem:[%s3] sm:$0x1]
  %v41 = vld [vmem:[%s4] sm:$0xff]
  %v42 = vld [vmem:[%s4 + $0x8] sm:$0xff]
  %v43 = vld [vmem:[%s4 + $0x10] sm:$0xff]
  %v44 = vld [vmem:[%s4 + $0x18] sm:$0xff]
  %v45 = vld [vmem:[%s4 + $0x20] sm:$0xff]
  %v46 = vld [vmem:[%s4 + $0x28] sm:$0xff]
  %v47 = vld [vmem:[%s4 + $0x30] sm:$0xff]
  %v48 = vld [vmem:[%s4 + $0x38] sm:$0xff]
  %v49 = vld [vmem:[%s5] sm:$0x1]
  %v50 = vld [vmem:[%s0] sm:$0xff]
  %v51 = vld [vmem:[%s0 + $0x8] sm:$0xff]
  %v52 = vld [vmem:[%s0 + $0x10] sm:$0xff]
  %v53 = vld [vmem:[%s0 + $0x18] sm:$0xff]
  %v54 = vld [vmem:[%s0 + $0x20] sm:$0xff]
  %v55 = vld [vmem:[%s0 + $0x28] sm:$0xff]
  %v56 = vld [vmem:[%s0 + $0x30] sm:$0xff]
  %v57 = vld [vmem:[%s0 + $0x38] sm:$0xff]
  %v59 = vperm.slane %v40, 0
  %vm61 = vcmask 130048
  %v63 = vsel %vm61, %v50, 0
  %v66 = vsel %vm61, %v51, 0
  %v69 = vsel %vm61, %v52, 0
  %v72 = vsel %vm61, %v53, 0
  %v75 = vsel %vm61, %v54, 0
  %v78 = vsel %vm61, %v55, 0
  %v81 = vsel %vm61, %v56, 0
  %v84 = vsel %vm61, %v57, 0
  %86 = vmatpush.msra.mxu0 0.0
  %87 = vmatpush.msra.mxu0 0.0
  %88 = vmatpush.msra.mxu0 0.0
  %89 = vmatpush.msra.mxu0 0.0
  %90 = vmatpush.msra.mxu0 0.0
  %91 = vmatpush.msra.mxu0 0.0
  %92 = vmatpush.msra.mxu0 0.0
  %93 = vmatpush.msra.mxu0 0.0
  %94 = vmatpush.msra.mxu0 0.0
  %95 = vmatpush.msra.mxu0 0.0
  %96 = vmatpush.msra.mxu0 0.0
  %97 = vmatpush.msra.mxu0 0.0
  %98 = vmatpush.msra.mxu0 0.0
  %99 = vmatpush.msra.mxu0 0.0
  %100 = vmatpush.msra.mxu0 %v35
  %101 = vmatpush.msra.mxu0 %v34
  %102 = vmatmul.f32.gmra.mxu0 %v63
  %v103 = vpop.f32.mrf.mxu0
  %v104 = vadd.f32 %v59, %v103
  %105 = vmatmul.f32.gmra.mxu0 %v66
  %v106 = vpop.f32.mrf.mxu0
  %v107 = vadd.f32 %v59, %v106
  %108 = vmatmul.f32.gmra.mxu0 %v69
  %v109 = vpop.f32.mrf.mxu0
  %v110 = vadd.f32 %v59, %v109
  %111 = vmatmul.f32.gmra.mxu0 %v72
  %v112 = vpop.f32.mrf.mxu0
  %v113 = vadd.f32 %v59, %v112
  %114 = vmatmul.f32.gmra.mxu0 %v75
  %v115 = vpop.f32.mrf.mxu0
  %v116 = vadd.f32 %v59, %v115
  %117 = vmatmul.f32.gmra.mxu0 %v78
  %v118 = vpop.f32.mrf.mxu0
  %v119 = vadd.f32 %v59, %v118
  %120 = vmatmul.f32.gmra.mxu0 %v81
  %v121 = vpop.f32.mrf.mxu0
  %v122 = vadd.f32 %v59, %v121
  %123 = vmatmul.f32.gmra.mxu0 %v84
  %v124 = vpop.f32.mrf.mxu0
  %v125 = vadd.f32 %v59, %v124
  %126 = vdwg.mxu0
  %v127 = vlaneseq
  %v128 = vand.u32 %v127, 127
  %vm129 = vcmp.lt.s32.totalorder %v128, 96
  %vm130 = vcmask 261120
  %v132 = vsel %vm130, 0.0, 0
  %134 = vmatpush.msra.mxu0 0.0
  %135 = vmatpush.msra.mxu0 0.0
  %136 = vmatpush.msra.mxu0 0.0
  %137 = vmatpush.msra.mxu0 0.0
  %138 = vmatpush.msra.mxu0 0.0
  %139 = vmatpush.msra.mxu0 0.0
  %140 = vmatpush.msra.mxu0 0.0
  %141 = vmatpush.msra.mxu0 0.0
  %142 = vmatpush.msra.mxu0 0.0
  %143 = vmatpush.msra.mxu0 0.0
  %144 = vmatpush.msra.mxu0 0.0
  %145 = vmatpush.msra.mxu0 0.0
  %146 = vmatpush.msra.mxu0 %v39
  %147 = vmatpush.msra.mxu0 %v38
  %148 = vmatpush.msra.mxu0 %v37
  %149 = vmatpush.msra.mxu0 %v36
  %150 = vmatmul.f32.gmra.mxu0 %v132
  %v151 = vpop.f32.mrf.mxu0
  %v152 = vadd.f32 0.0, %v151
  %153 = vdwg.mxu0
  %v154 = vadd.f32 %v104, %v152
  %v155 = vxor.u32 %v154, 2147483648
  %v156 = vmul.f32 %v155, 1.442695
  %v157 = vpow.pop %v156
  %v158 = vadd.f32 %v157, 1.0
  %v159 = vrcp.pop %v158
  %v160 = vmul.f32 %v158, %v159
  %v161 = vsub.f32 1.0, %v160
  %v162 = vmul.f32 %v159, %v161
  %v163 = vadd.f32 %v159, %v162
  %vm164 = vweird.f32 %v158
  %vm165 = vweird.f32 %v159
  %vm166 = vmor %vm164, %vm165
  %v167 = vsel %vm166, %v159, %v163
  %v168 = vand.u32 2147483647, %v158
  %vm169 = vcmp.eq.f32.partialorder %v168, 8.507059e+37
  %v170 = vand.u32 %v158, 2147483648
  %v171 = vor.u32 1.1754944e-38, %v170
  %v172 = vsel %vm169, %v171, %v167
  %v173 = vmul.f32 1.0, %v172
  %v174 = vtanh.pop %v154
  %v175 = vsel %vm129, %v173, %v174
  %v176 = vmul.f32 %v175, 0.0
  %178 = vrot.lane.b32.xlu0 %v175, 32
  %v179 = vpop.permute.xlu0 %178
  %v181 = vmul.f32 %v175, %v179
  %183 = vrot.lane.b32.xlu0 %v181, 32
  %v184 = vpop.permute.xlu0 %183
  %v186 = vadd.f32 %v176, %v184
  %v187 = vtanh.pop %v186
  %189 = vrot.lane.b32.xlu0 %v187, 32
  %v190 = vpop.permute.xlu0 %189
  %v192 = vmul.f32 %v175, %v190
  %194 = vrot.lane.b32.xlu0 %v192, 64
  %v195 = vpop.permute.xlu0 %194
  %v197 = vsel %vm130, %v195, 0.0
  %v199 = vperm.slane %v49, 0
  %vm201 = vcmask 523264
  %v203 = vsel %vm201, %v197, 0
  %205 = vmatpush.msra.mxu0 0.0
  %206 = vmatpush.msra.mxu0 0.0
  %207 = vmatpush.msra.mxu0 0.0
  %208 = vmatpush.msra.mxu0 0.0
  %209 = vmatpush.msra.mxu0 0.0
  %210 = vmatpush.msra.mxu0 0.0
  %211 = vmatpush.msra.mxu0 0.0
  %212 = vmatpush.msra.mxu0 0.0
  %213 = vmatpush.msra.mxu0 %v48
  %214 = vmatpush.msra.mxu0 %v47
  %215 = vmatpush.msra.mxu0 %v46
  %216 = vmatpush.msra.mxu0 %v45
  %217 = vmatpush.msra.mxu0 %v44
  %218 = vmatpush.msra.mxu0 %v43
  %219 = vmatpush.msra.mxu0 %v42
  %220 = vmatpush.msra.mxu0 %v41
  %221 = vmatmul.f32.gmra.mxu0 %v203
  %v222 = vpop.f32.mrf.mxu0
  %v223 = vadd.f32 %v199, %v222
  %224 = vdwg.mxu0
  %v225 = vxor.u32 %v223, 2147483648
  %v226 = vmul.f32 %v225, 1.442695
  %v227 = vpow.pop %v226
  %v228 = vadd.f32 %v227, 1.0
  %v229 = vrcp.pop %v228
  %v230 = vmul.f32 %v228, %v229
  %v231 = vsub.f32 1.0, %v230
  %v232 = vmul.f32 %v229, %v231
  %v233 = vadd.f32 %v229, %v232
  %vm234 = vweird.f32 %v228
  %vm235 = vweird.f32 %v229
  %vm236 = vmor %vm234, %vm235
  %v237 = vsel %vm236, %v229, %v233
  %v238 = vand.u32 2147483647, %v228
  %vm239 = vcmp.eq.f32.partialorder %v238, 8.507059e+37
  %v240 = vand.u32 %v228, 2147483648
  %v241 = vor.u32 1.1754944e-38, %v240
  %v242 = vsel %vm239, %v241, %v237
  %v243 = vmul.f32 1.0, %v242
  %v244 = vtanh.pop %v223
  %v245 = vsel %vm129, %v243, %v244
  %v246 = vmul.f32 %v245, 0.0
  %248 = vrot.lane.b32.xlu0 %v245, 32
  %v249 = vpop.permute.xlu0 %248
  %v251 = vmul.f32 %v245, %v249
  %253 = vrot.lane.b32.xlu0 %v251, 32
  %v254 = vpop.permute.xlu0 %253
  %v256 = vadd.f32 %v246, %v254
  %v257 = vtanh.pop %v256
  %259 = vrot.lane.b32.xlu0 %v257, 32
  %v260 = vpop.permute.xlu0 %259
  %v262 = vmul.f32 %v245, %v260
  %v263 = vsel %vm130, %v195, 0
  %265 = vmatpush.msra.mxu0 0.0
  %266 = vmatpush.msra.mxu0 0.0
  %267 = vmatpush.msra.mxu0 0.0
  %268 = vmatpush.msra.mxu0 0.0
  %269 = vmatpush.msra.mxu0 0.0
  %270 = vmatpush.msra.mxu0 0.0
  %271 = vmatpush.msra.mxu0 0.0
  %272 = vmatpush.msra.mxu0 0.0
  %273 = vmatpush.msra.mxu0 0.0
  %274 = vmatpush.msra.mxu0 0.0
  %275 = vmatpush.msra.mxu0 0.0
  %276 = vmatpush.msra.mxu0 0.0
  %277 = vmatpush.msra.mxu0 %v39
  %278 = vmatpush.msra.mxu0 %v38
  %279 = vmatpush.msra.mxu0 %v37
  %280 = vmatpush.msra.mxu0 %v36
  %281 = vmatmul.f32.gmra.mxu0 %v263
  %v282 = vpop.f32.mrf.mxu0
  %v283 = vadd.f32 0.0, %v282
  %284 = vdwg.mxu0
  %v285 = vadd.f32 %v107, %v283
  %v286 = vxor.u32 %v285, 2147483648
  %v287 = vmul.f32 %v286, 1.442695
  %v288 = vpow.pop %v287
  %v289 = vadd.f32 %v288, 1.0
  %v290 = vrcp.pop %v289
  %v291 = vmul.f32 %v289, %v290
  %v292 = vsub.f32 1.0, %v291
  %v293 = vmul.f32 %v290, %v292
  %v294 = vadd.f32 %v290, %v293
  %vm295 = vweird.f32 %v289
  %vm296 = vweird.f32 %v290
  %vm297 = vmor %vm295, %vm296
  %v298 = vsel %vm297, %v290, %v294
  %v299 = vand.u32 2147483647, %v289
  %vm300 = vcmp.eq.f32.partialorder %v299, 8.507059e+37
  %v301 = vand.u32 %v289, 2147483648
  %v302 = vor.u32 1.1754944e-38, %v301
  %v303 = vsel %vm300, %v302, %v298
  %v304 = vmul.f32 1.0, %v303
  %v305 = vtanh.pop %v285
  %v306 = vsel %vm129, %v304, %v305
  %v307 = vmul.f32 %v306, %v186
  %309 = vrot.lane.b32.xlu0 %v306, 32
  %v310 = vpop.permute.xlu0 %309
  %v312 = vmul.f32 %v306, %v310
  %314 = vrot.lane.b32.xlu0 %v312, 32
  %v315 = vpop.permute.xlu0 %314
  %v317 = vadd.f32 %v307, %v315
  %v318 = vtanh.pop %v317
  %320 = vrot.lane.b32.xlu0 %v318, 32
  %v321 = vpop.permute.xlu0 %320
  %v323 = vmul.f32 %v306, %v321
  %325 = vrot.lane.b32.xlu0 %v323, 64
  %v326 = vpop.permute.xlu0 %325
  %329 = vrot.lane.b32.xlu0 %v262, 96
  %v330 = vpop.permute.xlu0 %329
  %v332 = vsel %vm130, %v326, %v330
  %v334 = vsel %vm201, %v332, 0
  %336 = vmatpush.msra.mxu0 0.0
  %337 = vmatpush.msra.mxu0 0.0
  %338 = vmatpush.msra.mxu0 0.0
  %339 = vmatpush.msra.mxu0 0.0
  %340 = vmatpush.msra.mxu0 0.0
  %341 = vmatpush.msra.mxu0 0.0
  %342 = vmatpush.msra.mxu0 0.0
  %343 = vmatpush.msra.mxu0 0.0
  %344 = vmatpush.msra.mxu0 %v48
  %345 = vmatpush.msra.mxu0 %v47
  %346 = vmatpush.msra.mxu0 %v46
  %347 = vmatpush.msra.mxu0 %v45
  %348 = vmatpush.msra.mxu0 %v44
  %349 = vmatpush.msra.mxu0 %v43
  %350 = vmatpush.msra.mxu0 %v42
  %351 = vmatpush.msra.mxu0 %v41
  %352 = vmatmul.f32.gmra.mxu0 %v334
  %v353 = vpop.f32.mrf.mxu0
  %v354 = vadd.f32 %v199, %v353
  %355 = vdwg.mxu0
  %v356 = vxor.u32 %v354, 2147483648
  %v357 = vmul.f32 %v356, 1.442695
  %v358 = vpow.pop %v357
  %v359 = vadd.f32 %v358, 1.0
  %v360 = vrcp.pop %v359
  %v361 = vmul.f32 %v359, %v360
  %v362 = vsub.f32 1.0, %v361
  %v363 = vmul.f32 %v360, %v362
  %v364 = vadd.f32 %v360, %v363
  %vm365 = vweird.f32 %v359
  %vm366 = vweird.f32 %v360
  %vm367 = vmor %vm365, %vm366
  %v368 = vsel %vm367, %v360, %v364
  %v369 = vand.u32 2147483647, %v359
  %vm370 = vcmp.eq.f32.partialorder %v369, 8.507059e+37
  %v371 = vand.u32 %v359, 2147483648
  %v372 = vor.u32 1.1754944e-38, %v371
  %v373 = vsel %vm370, %v372, %v368
  %v374 = vmul.f32 1.0, %v373
  %v375 = vtanh.pop %v354
  %v376 = vsel %vm129, %v374, %v375
  %v377 = vmul.f32 %v376, %v256
  %379 = vrot.lane.b32.xlu0 %v376, 32
  %v380 = vpop.permute.xlu0 %379
  %v382 = vmul.f32 %v376, %v380
  %384 = vrot.lane.b32.xlu0 %v382, 32
  %v385 = vpop.permute.xlu0 %384
  %v387 = vadd.f32 %v377, %v385
  %v388 = vtanh.pop %v387
  %390 = vrot.lane.b32.xlu0 %v388, 32
  %v391 = vpop.permute.xlu0 %390
  %v393 = vmul.f32 %v376, %v391
  %v394 = vsel %vm130, %v326, 0
  %396 = vmatpush.msra.mxu0 0.0
  %397 = vmatpush.msra.mxu0 0.0
  %398 = vmatpush.msra.mxu0 0.0
  %399 = vmatpush.msra.mxu0 0.0
  %400 = vmatpush.msra.mxu0 0.0
  %401 = vmatpush.msra.mxu0 0.0
  %402 = vmatpush.msra.mxu0 0.0
  %403 = vmatpush.msra.mxu0 0.0
  %404 = vmatpush.msra.mxu0 0.0
  %405 = vmatpush.msra.mxu0 0.0
  %406 = vmatpush.msra.mxu0 0.0
  %407 = vmatpush.msra.mxu0 0.0
  %408 = vmatpush.msra.mxu0 %v39
  %409 = vmatpush.msra.mxu0 %v38
  %410 = vmatpush.msra.mxu0 %v37
  %411 = vmatpush.msra.mxu0 %v36
  %412 = vmatmul.f32.gmra.mxu0 %v394
  %v413 = vpop.f32.mrf.mxu0
  %v414 = vadd.f32 0.0, %v413
  %415 = vdwg.mxu0
  %v416 = vadd.f32 %v110, %v414
  %v417 = vxor.u32 %v416, 2147483648
  %v418 = vmul.f32 %v417, 1.442695
  %v419 = vpow.pop %v418
  %v420 = vadd.f32 %v419, 1.0
  %v421 = vrcp.pop %v420
  %v422 = vmul.f32 %v420, %v421
  %v423 = vsub.f32 1.0, %v422
  %v424 = vmul.f32 %v421, %v423
  %v425 = vadd.f32 %v421, %v424
  %vm426 = vweird.f32 %v420
  %vm427 = vweird.f32 %v421
  %vm428 = vmor %vm426, %vm427
  %v429 = vsel %vm428, %v421, %v425
  %v430 = vand.u32 2147483647, %v420
  %vm431 = vcmp.eq.f32.partialorder %v430, 8.507059e+37
  %v432 = vand.u32 %v420, 2147483648
  %v433 = vor.u32 1.1754944e-38, %v432
  %v434 = vsel %vm431, %v433, %v429
  %v435 = vmul.f32 1.0, %v434
  %v436 = vtanh.pop %v416
  %v437 = vsel %vm129, %v435, %v436
  %v438 = vmul.f32 %v437, %v317
  %440 = vrot.lane.b32.xlu0 %v437, 32
  %v441 = vpop.permute.xlu0 %440
  %v443 = vmul.f32 %v437, %v441
  %445 = vrot.lane.b32.xlu0 %v443, 32
  %v446 = vpop.permute.xlu0 %445
  %v448 = vadd.f32 %v438, %v446
  %v449 = vtanh.pop %v448
  %451 = vrot.lane.b32.xlu0 %v449, 32
  %v452 = vpop.permute.xlu0 %451
  %v454 = vmul.f32 %v437, %v452
  %456 = vrot.lane.b32.xlu0 %v454, 64
  %v457 = vpop.permute.xlu0 %456
  %460 = vrot.lane.b32.xlu0 %v393, 96
  %v461 = vpop.permute.xlu0 %460
  %v463 = vsel %vm130, %v457, %v461
  %v465 = vsel %vm201, %v463, 0
  %467 = vmatpush.msra.mxu0 0.0
  %468 = vmatpush.msra.mxu0 0.0
  %469 = vmatpush.msra.mxu0 0.0
  %470 = vmatpush.msra.mxu0 0.0
  %471 = vmatpush.msra.mxu0 0.0
  %472 = vmatpush.msra.mxu0 0.0
  %473 = vmatpush.msra.mxu0 0.0
  %474 = vmatpush.msra.mxu0 0.0
  %475 = vmatpush.msra.mxu0 %v48
  %476 = vmatpush.msra.mxu0 %v47
  %477 = vmatpush.msra.mxu0 %v46
  %478 = vmatpush.msra.mxu0 %v45
  %479 = vmatpush.msra.mxu0 %v44
  %480 = vmatpush.msra.mxu0 %v43
  %481 = vmatpush.msra.mxu0 %v42
  %482 = vmatpush.msra.mxu0 %v41
  %483 = vmatmul.f32.gmra.mxu0 %v465
  %v484 = vpop.f32.mrf.mxu0
  %v485 = vadd.f32 %v199, %v484
  %486 = vdwg.mxu0
  %v487 = vxor.u32 %v485, 2147483648
  %v488 = vmul.f32 %v487, 1.442695
  %v489 = vpow.pop %v488
  %v490 = vadd.f32 %v489, 1.0
  %v491 = vrcp.pop %v490
  %v492 = vmul.f32 %v490, %v491
  %v493 = vsub.f32 1.0, %v492
  %v494 = vmul.f32 %v491, %v493
  %v495 = vadd.f32 %v491, %v494
  %vm496 = vweird.f32 %v490
  %vm497 = vweird.f32 %v491
  %vm498 = vmor %vm496, %vm497
  %v499 = vsel %vm498, %v491, %v495
  %v500 = vand.u32 2147483647, %v490
  %vm501 = vcmp.eq.f32.partialorder %v500, 8.507059e+37
  %v502 = vand.u32 %v490, 2147483648
  %v503 = vor.u32 1.1754944e-38, %v502
  %v504 = vsel %vm501, %v503, %v499
  %v505 = vmul.f32 1.0, %v504
  %v506 = vtanh.pop %v485
  %v507 = vsel %vm129, %v505, %v506
  %v508 = vmul.f32 %v507, %v387
  %510 = vrot.lane.b32.xlu0 %v507, 32
  %v511 = vpop.permute.xlu0 %510
  %v513 = vmul.f32 %v507, %v511
  %515 = vrot.lane.b32.xlu0 %v513, 32
  %v516 = vpop.permute.xlu0 %515
  %v518 = vadd.f32 %v508, %v516
  %v519 = vtanh.pop %v518
  %521 = vrot.lane.b32.xlu0 %v519, 32
  %v522 = vpop.permute.xlu0 %521
  %v524 = vmul.f32 %v507, %v522
  %v525 = vsel %vm130, %v457, 0
  %527 = vmatpush.msra.mxu0 0.0
  %528 = vmatpush.msra.mxu0 0.0
  %529 = vmatpush.msra.mxu0 0.0
  %530 = vmatpush.msra.mxu0 0.0
  %531 = vmatpush.msra.mxu0 0.0
  %532 = vmatpush.msra.mxu0 0.0
  %533 = vmatpush.msra.mxu0 0.0
  %534 = vmatpush.msra.mxu0 0.0
  %535 = vmatpush.msra.mxu0 0.0
  %536 = vmatpush.msra.mxu0 0.0
  %537 = vmatpush.msra.mxu0 0.0
  %538 = vmatpush.msra.mxu0 0.0
  %539 = vmatpush.msra.mxu0 %v39
  %540 = vmatpush.msra.mxu0 %v38
  %541 = vmatpush.msra.mxu0 %v37
  %542 = vmatpush.msra.mxu0 %v36
  %543 = vmatmul.f32.gmra.mxu0 %v525
  %v544 = vpop.f32.mrf.mxu0
  %v545 = vadd.f32 0.0, %v544
  %546 = vdwg.mxu0
  %v547 = vadd.f32 %v113, %v545
  %v548 = vxor.u32 %v547, 2147483648
  %v549 = vmul.f32 %v548, 1.442695
  %v550 = vpow.pop %v549
  %v551 = vadd.f32 %v550, 1.0
  %v552 = vrcp.pop %v551
  %v553 = vmul.f32 %v551, %v552
  %v554 = vsub.f32 1.0, %v553
  %v555 = vmul.f32 %v552, %v554
  %v556 = vadd.f32 %v552, %v555
  %vm557 = vweird.f32 %v551
  %vm558 = vweird.f32 %v552
  %vm559 = vmor %vm557, %vm558
  %v560 = vsel %vm559, %v552, %v556
  %v561 = vand.u32 2147483647, %v551
  %vm562 = vcmp.eq.f32.partialorder %v561, 8.507059e+37
  %v563 = vand.u32 %v551, 2147483648
  %v564 = vor.u32 1.1754944e-38, %v563
  %v565 = vsel %vm562, %v564, %v560
  %v566 = vmul.f32 1.0, %v565
  %v567 = vtanh.pop %v547
  %v568 = vsel %vm129, %v566, %v567
  %v569 = vmul.f32 %v568, %v448
  %571 = vrot.lane.b32.xlu0 %v568, 32
  %v572 = vpop.permute.xlu0 %571
  %v574 = vmul.f32 %v568, %v572
  %576 = vrot.lane.b32.xlu0 %v574, 32
  %v577 = vpop.permute.xlu0 %576
  %v579 = vadd.f32 %v569, %v577
  %v580 = vtanh.pop %v579
  %582 = vrot.lane.b32.xlu0 %v580, 32
  %v583 = vpop.permute.xlu0 %582
  %v585 = vmul.f32 %v568, %v583
  %587 = vrot.lane.b32.xlu0 %v585, 64
  %v588 = vpop.permute.xlu0 %587
  %591 = vrot.lane.b32.xlu0 %v524, 96
  %v592 = vpop.permute.xlu0 %591
  %v594 = vsel %vm130, %v588, %v592
  %v596 = vsel %vm201, %v594, 0
  %598 = vmatpush.msra.mxu0 0.0
  %599 = vmatpush.msra.mxu0 0.0
  %600 = vmatpush.msra.mxu0 0.0
  %601 = vmatpush.msra.mxu0 0.0
  %602 = vmatpush.msra.mxu0 0.0
  %603 = vmatpush.msra.mxu0 0.0
  %604 = vmatpush.msra.mxu0 0.0
  %605 = vmatpush.msra.mxu0 0.0
  %606 = vmatpush.msra.mxu0 %v48
  %607 = vmatpush.msra.mxu0 %v47
  %608 = vmatpush.msra.mxu0 %v46
  %609 = vmatpush.msra.mxu0 %v45
  %610 = vmatpush.msra.mxu0 %v44
  %611 = vmatpush.msra.mxu0 %v43
  %612 = vmatpush.msra.mxu0 %v42
  %613 = vmatpush.msra.mxu0 %v41
  %614 = vmatmul.f32.gmra.mxu0 %v596
  %v615 = vpop.f32.mrf.mxu0
  %v616 = vadd.f32 %v199, %v615
  %617 = vdwg.mxu0
  %v618 = vxor.u32 %v616, 2147483648
  %v619 = vmul.f32 %v618, 1.442695
  %v620 = vpow.pop %v619
  %v621 = vadd.f32 %v620, 1.0
  %v622 = vrcp.pop %v621
  %v623 = vmul.f32 %v621, %v622
  %v624 = vsub.f32 1.0, %v623
  %v625 = vmul.f32 %v622, %v624
  %v626 = vadd.f32 %v622, %v625
  %vm627 = vweird.f32 %v621
  %vm628 = vweird.f32 %v622
  %vm629 = vmor %vm627, %vm628
  %v630 = vsel %vm629, %v622, %v626
  %v631 = vand.u32 2147483647, %v621
  %vm632 = vcmp.eq.f32.partialorder %v631, 8.507059e+37
  %v633 = vand.u32 %v621, 2147483648
  %v634 = vor.u32 1.1754944e-38, %v633
  %v635 = vsel %vm632, %v634, %v630
  %v636 = vmul.f32 1.0, %v635
  %v637 = vtanh.pop %v616
  %v638 = vsel %vm129, %v636, %v637
  %v639 = vmul.f32 %v638, %v518
  %641 = vrot.lane.b32.xlu0 %v638, 32
  %v642 = vpop.permute.xlu0 %641
  %v644 = vmul.f32 %v638, %v642
  %646 = vrot.lane.b32.xlu0 %v644, 32
  %v647 = vpop.permute.xlu0 %646
  %v649 = vadd.f32 %v639, %v647
  %v650 = vtanh.pop %v649
  %652 = vrot.lane.b32.xlu0 %v650, 32
  %v653 = vpop.permute.xlu0 %652
  %v655 = vmul.f32 %v638, %v653
  %v656 = vsel %vm130, %v588, 0
  %658 = vmatpush.msra.mxu0 0.0
  %659 = vmatpush.msra.mxu0 0.0
  %660 = vmatpush.msra.mxu0 0.0
  %661 = vmatpush.msra.mxu0 0.0
  %662 = vmatpush.msra.mxu0 0.0
  %663 = vmatpush.msra.mxu0 0.0
  %664 = vmatpush.msra.mxu0 0.0
  %665 = vmatpush.msra.mxu0 0.0
  %666 = vmatpush.msra.mxu0 0.0
  %667 = vmatpush.msra.mxu0 0.0
  %668 = vmatpush.msra.mxu0 0.0
  %669 = vmatpush.msra.mxu0 0.0
  %670 = vmatpush.msra.mxu0 %v39
  %671 = vmatpush.msra.mxu0 %v38
  %672 = vmatpush.msra.mxu0 %v37
  %673 = vmatpush.msra.mxu0 %v36
  %674 = vmatmul.f32.gmra.mxu0 %v656
  %v675 = vpop.f32.mrf.mxu0
  %v676 = vadd.f32 0.0, %v675
  %677 = vdwg.mxu0
  %v678 = vadd.f32 %v116, %v676
  %v679 = vxor.u32 %v678, 2147483648
  %v680 = vmul.f32 %v679, 1.442695
  %v681 = vpow.pop %v680
  %v682 = vadd.f32 %v681, 1.0
  %v683 = vrcp.pop %v682
  %v684 = vmul.f32 %v682, %v683
  %v685 = vsub.f32 1.0, %v684
  %v686 = vmul.f32 %v683, %v685
  %v687 = vadd.f32 %v683, %v686
  %vm688 = vweird.f32 %v682
  %vm689 = vweird.f32 %v683
  %vm690 = vmor %vm688, %vm689
  %v691 = vsel %vm690, %v683, %v687
  %v692 = vand.u32 2147483647, %v682
  %vm693 = vcmp.eq.f32.partialorder %v692, 8.507059e+37
  %v694 = vand.u32 %v682, 2147483648
  %v695 = vor.u32 1.1754944e-38, %v694
  %v696 = vsel %vm693, %v695, %v691
  %v697 = vmul.f32 1.0, %v696
  %v698 = vtanh.pop %v678
  %v699 = vsel %vm129, %v697, %v698
  %v700 = vmul.f32 %v699, %v579
  %702 = vrot.lane.b32.xlu0 %v699, 32
  %v703 = vpop.permute.xlu0 %702
  %v705 = vmul.f32 %v699, %v703
  %707 = vrot.lane.b32.xlu0 %v705, 32
  %v708 = vpop.permute.xlu0 %707
  %v710 = vadd.f32 %v700, %v708
  %v711 = vtanh.pop %v710
  %713 = vrot.lane.b32.xlu0 %v711, 32
  %v714 = vpop.permute.xlu0 %713
  %v716 = vmul.f32 %v699, %v714
  %718 = vrot.lane.b32.xlu0 %v716, 64
  %v719 = vpop.permute.xlu0 %718
  %722 = vrot.lane.b32.xlu0 %v655, 96
  %v723 = vpop.permute.xlu0 %722
  %v725 = vsel %vm130, %v719, %v723
  %v727 = vsel %vm201, %v725, 0
  %729 = vmatpush.msra.mxu0 0.0
  %730 = vmatpush.msra.mxu0 0.0
  %731 = vmatpush.msra.mxu0 0.0
  %732 = vmatpush.msra.mxu0 0.0
  %733 = vmatpush.msra.mxu0 0.0
  %734 = vmatpush.msra.mxu0 0.0
  %735 = vmatpush.msra.mxu0 0.0
  %736 = vmatpush.msra.mxu0 0.0
  %737 = vmatpush.msra.mxu0 %v48
  %738 = vmatpush.msra.mxu0 %v47
  %739 = vmatpush.msra.mxu0 %v46
  %740 = vmatpush.msra.mxu0 %v45
  %741 = vmatpush.msra.mxu0 %v44
  %742 = vmatpush.msra.mxu0 %v43
  %743 = vmatpush.msra.mxu0 %v42
  %744 = vmatpush.msra.mxu0 %v41
  %745 = vmatmul.f32.gmra.mxu0 %v727
  %v746 = vpop.f32.mrf.mxu0
  %v747 = vadd.f32 %v199, %v746
  %748 = vdwg.mxu0
  %v749 = vxor.u32 %v747, 2147483648
  %v750 = vmul.f32 %v749, 1.442695
  %v751 = vpow.pop %v750
  %v752 = vadd.f32 %v751, 1.0
  %v753 = vrcp.pop %v752
  %v754 = vmul.f32 %v752, %v753
  %v755 = vsub.f32 1.0, %v754
  %v756 = vmul.f32 %v753, %v755
  %v757 = vadd.f32 %v753, %v756
  %vm758 = vweird.f32 %v752
  %vm759 = vweird.f32 %v753
  %vm760 = vmor %vm758, %vm759
  %v761 = vsel %vm760, %v753, %v757
  %v762 = vand.u32 2147483647, %v752
  %vm763 = vcmp.eq.f32.partialorder %v762, 8.507059e+37
  %v764 = vand.u32 %v752, 2147483648
  %v765 = vor.u32 1.1754944e-38, %v764
  %v766 = vsel %vm763, %v765, %v761
  %v767 = vmul.f32 1.0, %v766
  %v768 = vtanh.pop %v747
  %v769 = vsel %vm129, %v767, %v768
  %v770 = vmul.f32 %v769, %v649
  %772 = vrot.lane.b32.xlu0 %v769, 32
  %v773 = vpop.permute.xlu0 %772
  %v775 = vmul.f32 %v769, %v773
  %777 = vrot.lane.b32.xlu0 %v775, 32
  %v778 = vpop.permute.xlu0 %777
  %v780 = vadd.f32 %v770, %v778
  %v781 = vtanh.pop %v780
  %783 = vrot.lane.b32.xlu0 %v781, 32
  %v784 = vpop.permute.xlu0 %783
  %v786 = vmul.f32 %v769, %v784
  %v787 = vsel %vm130, %v719, 0
  %789 = vmatpush.msra.mxu0 0.0
  %790 = vmatpush.msra.mxu0 0.0
  %791 = vmatpush.msra.mxu0 0.0
  %792 = vmatpush.msra.mxu0 0.0
  %793 = vmatpush.msra.mxu0 0.0
  %794 = vmatpush.msra.mxu0 0.0
  %795 = vmatpush.msra.mxu0 0.0
  %796 = vmatpush.msra.mxu0 0.0
  %797 = vmatpush.msra.mxu0 0.0
  %798 = vmatpush.msra.mxu0 0.0
  %799 = vmatpush.msra.mxu0 0.0
  %800 = vmatpush.msra.mxu0 0.0
  %801 = vmatpush.msra.mxu0 %v39
  %802 = vmatpush.msra.mxu0 %v38
  %803 = vmatpush.msra.mxu0 %v37
  %804 = vmatpush.msra.mxu0 %v36
  %805 = vmatmul.f32.gmra.mxu0 %v787
  %v806 = vpop.f32.mrf.mxu0
  %v807 = vadd.f32 0.0, %v806
  %808 = vdwg.mxu0
  %v809 = vadd.f32 %v119, %v807
  %v810 = vxor.u32 %v809, 2147483648
  %v811 = vmul.f32 %v810, 1.442695
  %v812 = vpow.pop %v811
  %v813 = vadd.f32 %v812, 1.0
  %v814 = vrcp.pop %v813
  %v815 = vmul.f32 %v813, %v814
  %v816 = vsub.f32 1.0, %v815
  %v817 = vmul.f32 %v814, %v816
  %v818 = vadd.f32 %v814, %v817
  %vm819 = vweird.f32 %v813
  %vm820 = vweird.f32 %v814
  %vm821 = vmor %vm819, %vm820
  %v822 = vsel %vm821, %v814, %v818
  %v823 = vand.u32 2147483647, %v813
  %vm824 = vcmp.eq.f32.partialorder %v823, 8.507059e+37
  %v825 = vand.u32 %v813, 2147483648
  %v826 = vor.u32 1.1754944e-38, %v825
  %v827 = vsel %vm824, %v826, %v822
  %v828 = vmul.f32 1.0, %v827
  %v829 = vtanh.pop %v809
  %v830 = vsel %vm129, %v828, %v829
  %v831 = vmul.f32 %v830, %v710
  %833 = vrot.lane.b32.xlu0 %v830, 32
  %v834 = vpop.permute.xlu0 %833
  %v836 = vmul.f32 %v830, %v834
  %838 = vrot.lane.b32.xlu0 %v836, 32
  %v839 = vpop.permute.xlu0 %838
  %v841 = vadd.f32 %v831, %v839
  %v842 = vtanh.pop %v841
  %844 = vrot.lane.b32.xlu0 %v842, 32
  %v845 = vpop.permute.xlu0 %844
  %v847 = vmul.f32 %v830, %v845
  %849 = vrot.lane.b32.xlu0 %v847, 64
  %v850 = vpop.permute.xlu0 %849
  %853 = vrot.lane.b32.xlu0 %v786, 96
  %v854 = vpop.permute.xlu0 %853
  %v856 = vsel %vm130, %v850, %v854
  %v858 = vsel %vm201, %v856, 0
  %860 = vmatpush.msra.mxu0 0.0
  %861 = vmatpush.msra.mxu0 0.0
  %862 = vmatpush.msra.mxu0 0.0
  %863 = vmatpush.msra.mxu0 0.0
  %864 = vmatpush.msra.mxu0 0.0
  %865 = vmatpush.msra.mxu0 0.0
  %866 = vmatpush.msra.mxu0 0.0
  %867 = vmatpush.msra.mxu0 0.0
  %868 = vmatpush.msra.mxu0 %v48
  %869 = vmatpush.msra.mxu0 %v47
  %870 = vmatpush.msra.mxu0 %v46
  %871 = vmatpush.msra.mxu0 %v45
  %872 = vmatpush.msra.mxu0 %v44
  %873 = vmatpush.msra.mxu0 %v43
  %874 = vmatpush.msra.mxu0 %v42
  %875 = vmatpush.msra.mxu0 %v41
  %876 = vmatmul.f32.gmra.mxu0 %v858
  %v877 = vpop.f32.mrf.mxu0
  %v878 = vadd.f32 %v199, %v877
  %879 = vdwg.mxu0
  %v880 = vxor.u32 %v878, 2147483648
  %v881 = vmul.f32 %v880, 1.442695
  %v882 = vpow.pop %v881
  %v883 = vadd.f32 %v882, 1.0
  %v884 = vrcp.pop %v883
  %v885 = vmul.f32 %v883, %v884
  %v886 = vsub.f32 1.0, %v885
  %v887 = vmul.f32 %v884, %v886
  %v888 = vadd.f32 %v884, %v887
  %vm889 = vweird.f32 %v883
  %vm890 = vweird.f32 %v884
  %vm891 = vmor %vm889, %vm890
  %v892 = vsel %vm891, %v884, %v888
  %v893 = vand.u32 2147483647, %v883
  %vm894 = vcmp.eq.f32.partialorder %v893, 8.507059e+37
  %v895 = vand.u32 %v883, 2147483648
  %v896 = vor.u32 1.1754944e-38, %v895
  %v897 = vsel %vm894, %v896, %v892
  %v898 = vmul.f32 1.0, %v897
  %v899 = vtanh.pop %v878
  %v900 = vsel %vm129, %v898, %v899
  %v901 = vmul.f32 %v900, %v780
  %903 = vrot.lane.b32.xlu0 %v900, 32
  %v904 = vpop.permute.xlu0 %903
  %v906 = vmul.f32 %v900, %v904
  %908 = vrot.lane.b32.xlu0 %v906, 32
  %v909 = vpop.permute.xlu0 %908
  %v911 = vadd.f32 %v901, %v909
  %v912 = vtanh.pop %v911
  %914 = vrot.lane.b32.xlu0 %v912, 32
  %v915 = vpop.permute.xlu0 %914
  %v917 = vmul.f32 %v900, %v915
  %v918 = vsel %vm130, %v850, 0
  %920 = vmatpush.msra.mxu0 0.0
  %921 = vmatpush.msra.mxu0 0.0
  %922 = vmatpush.msra.mxu0 0.0
  %923 = vmatpush.msra.mxu0 0.0
  %924 = vmatpush.msra.mxu0 0.0
  %925 = vmatpush.msra.mxu0 0.0
  %926 = vmatpush.msra.mxu0 0.0
  %927 = vmatpush.msra.mxu0 0.0
  %928 = vmatpush.msra.mxu0 0.0
  %929 = vmatpush.msra.mxu0 0.0
  %930 = vmatpush.msra.mxu0 0.0
  %931 = vmatpush.msra.mxu0 0.0
  %932 = vmatpush.msra.mxu0 %v39
  %933 = vmatpush.msra.mxu0 %v38
  %934 = vmatpush.msra.mxu0 %v37
  %935 = vmatpush.msra.mxu0 %v36
  %936 = vmatmul.f32.gmra.mxu0 %v918
  %v937 = vpop.f32.mrf.mxu0
  %v938 = vadd.f32 0.0, %v937
  %939 = vdwg.mxu0
  %v940 = vadd.f32 %v122, %v938
  %v941 = vxor.u32 %v940, 2147483648
  %v942 = vmul.f32 %v941, 1.442695
  %v943 = vpow.pop %v942
  %v944 = vadd.f32 %v943, 1.0
  %v945 = vrcp.pop %v944
  %v946 = vmul.f32 %v944, %v945
  %v947 = vsub.f32 1.0, %v946
  %v948 = vmul.f32 %v945, %v947
  %v949 = vadd.f32 %v945, %v948
  %vm950 = vweird.f32 %v944
  %vm951 = vweird.f32 %v945
  %vm952 = vmor %vm950, %vm951
  %v953 = vsel %vm952, %v945, %v949
  %v954 = vand.u32 2147483647, %v944
  %vm955 = vcmp.eq.f32.partialorder %v954, 8.507059e+37
  %v956 = vand.u32 %v944, 2147483648
  %v957 = vor.u32 1.1754944e-38, %v956
  %v958 = vsel %vm955, %v957, %v953
  %v959 = vmul.f32 1.0, %v958
  %v960 = vtanh.pop %v940
  %v961 = vsel %vm129, %v959, %v960
  %v962 = vmul.f32 %v961, %v841
  %964 = vrot.lane.b32.xlu0 %v961, 32
  %v965 = vpop.permute.xlu0 %964
  %v967 = vmul.f32 %v961, %v965
  %969 = vrot.lane.b32.xlu0 %v967, 32
  %v970 = vpop.permute.xlu0 %969
  %v972 = vadd.f32 %v962, %v970
  %v973 = vtanh.pop %v972
  %975 = vrot.lane.b32.xlu0 %v973, 32
  %v976 = vpop.permute.xlu0 %975
  %v978 = vmul.f32 %v961, %v976
  %980 = vrot.lane.b32.xlu0 %v978, 64
  %v981 = vpop.permute.xlu0 %980
  %984 = vrot.lane.b32.xlu0 %v917, 96
  %v985 = vpop.permute.xlu0 %984
  %v987 = vsel %vm130, %v981, %v985
  %v989 = vsel %vm201, %v987, 0
  %991 = vmatpush.msra.mxu0 0.0
  %992 = vmatpush.msra.mxu0 0.0
  %993 = vmatpush.msra.mxu0 0.0
  %994 = vmatpush.msra.mxu0 0.0
  %995 = vmatpush.msra.mxu0 0.0
  %996 = vmatpush.msra.mxu0 0.0
  %997 = vmatpush.msra.mxu0 0.0
  %998 = vmatpush.msra.mxu0 0.0
  %999 = vmatpush.msra.mxu0 %v48
  %1000 = vmatpush.msra.mxu0 %v47
  %1001 = vmatpush.msra.mxu0 %v46
  %1002 = vmatpush.msra.mxu0 %v45
  %1003 = vmatpush.msra.mxu0 %v44
  %1004 = vmatpush.msra.mxu0 %v43
  %1005 = vmatpush.msra.mxu0 %v42
  %1006 = vmatpush.msra.mxu0 %v41
  %1007 = vmatmul.f32.gmra.mxu0 %v989
  %v1008 = vpop.f32.mrf.mxu0
  %v1009 = vadd.f32 %v199, %v1008
  %1010 = vdwg.mxu0
  %v1011 = vxor.u32 %v1009, 2147483648
  %v1012 = vmul.f32 %v1011, 1.442695
  %v1013 = vpow.pop %v1012
  %v1014 = vadd.f32 %v1013, 1.0
  %v1015 = vrcp.pop %v1014
  %v1016 = vmul.f32 %v1014, %v1015
  %v1017 = vsub.f32 1.0, %v1016
  %v1018 = vmul.f32 %v1015, %v1017
  %v1019 = vadd.f32 %v1015, %v1018
  %vm1020 = vweird.f32 %v1014
  %vm1021 = vweird.f32 %v1015
  %vm1022 = vmor %vm1020, %vm1021
  %v1023 = vsel %vm1022, %v1015, %v1019
  %v1024 = vand.u32 2147483647, %v1014
  %vm1025 = vcmp.eq.f32.partialorder %v1024, 8.507059e+37
  %v1026 = vand.u32 %v1014, 2147483648
  %v1027 = vor.u32 1.1754944e-38, %v1026
  %v1028 = vsel %vm1025, %v1027, %v1023
  %v1029 = vmul.f32 1.0, %v1028
  %v1030 = vtanh.pop %v1009
  %v1031 = vsel %vm129, %v1029, %v1030
  %v1032 = vmul.f32 %v1031, %v911
  %1034 = vrot.lane.b32.xlu0 %v1031, 32
  %v1035 = vpop.permute.xlu0 %1034
  %v1037 = vmul.f32 %v1031, %v1035
  %1039 = vrot.lane.b32.xlu0 %v1037, 32
  %v1040 = vpop.permute.xlu0 %1039
  %v1042 = vadd.f32 %v1032, %v1040
  %v1043 = vtanh.pop %v1042
  %1045 = vrot.lane.b32.xlu0 %v1043, 32
  %v1046 = vpop.permute.xlu0 %1045
  %v1048 = vmul.f32 %v1031, %v1046
  %v1049 = vsel %vm130, %v981, 0
  %1051 = vmatpush.msra.mxu0 0.0
  %1052 = vmatpush.msra.mxu0 0.0
  %1053 = vmatpush.msra.mxu0 0.0
  %1054 = vmatpush.msra.mxu0 0.0
  %1055 = vmatpush.msra.mxu0 0.0
  %1056 = vmatpush.msra.mxu0 0.0
  %1057 = vmatpush.msra.mxu0 0.0
  %1058 = vmatpush.msra.mxu0 0.0
  %1059 = vmatpush.msra.mxu0 0.0
  %1060 = vmatpush.msra.mxu0 0.0
  %1061 = vmatpush.msra.mxu0 0.0
  %1062 = vmatpush.msra.mxu0 0.0
  %1063 = vmatpush.msra.mxu0 %v39
  %1064 = vmatpush.msra.mxu0 %v38
  %1065 = vmatpush.msra.mxu0 %v37
  %1066 = vmatpush.msra.mxu0 %v36
  %1067 = vmatmul.f32.gmra.mxu0 %v1049
  %v1068 = vpop.f32.mrf.mxu0
  %v1069 = vadd.f32 0.0, %v1068
  %1070 = vdwg.mxu0
  %v1071 = vadd.f32 %v125, %v1069
  %v1072 = vxor.u32 %v1071, 2147483648
  %v1073 = vmul.f32 %v1072, 1.442695
  %v1074 = vpow.pop %v1073
  %v1075 = vadd.f32 %v1074, 1.0
  %v1076 = vrcp.pop %v1075
  %v1077 = vmul.f32 %v1075, %v1076
  %v1078 = vsub.f32 1.0, %v1077
  %v1079 = vmul.f32 %v1076, %v1078
  %v1080 = vadd.f32 %v1076, %v1079
  %vm1081 = vweird.f32 %v1075
  %vm1082 = vweird.f32 %v1076
  %vm1083 = vmor %vm1081, %vm1082
  %v1084 = vsel %vm1083, %v1076, %v1080
  %v1085 = vand.u32 2147483647, %v1075
  %vm1086 = vcmp.eq.f32.partialorder %v1085, 8.507059e+37
  %v1087 = vand.u32 %v1075, 2147483648
  %v1088 = vor.u32 1.1754944e-38, %v1087
  %v1089 = vsel %vm1086, %v1088, %v1084
  %v1090 = vmul.f32 1.0, %v1089
  %v1091 = vtanh.pop %v1071
  %v1092 = vsel %vm129, %v1090, %v1091
  %v1093 = vmul.f32 %v1092, %v972
  %1095 = vrot.lane.b32.xlu0 %v1092, 32
  %v1096 = vpop.permute.xlu0 %1095
  %v1098 = vmul.f32 %v1092, %v1096
  %1100 = vrot.lane.b32.xlu0 %v1098, 32
  %v1101 = vpop.permute.xlu0 %1100
  %v1103 = vadd.f32 %v1093, %v1101
  %v1104 = vtanh.pop %v1103
  %1106 = vrot.lane.b32.xlu0 %v1104, 32
  %v1107 = vpop.permute.xlu0 %1106
  %v1109 = vmul.f32 %v1092, %v1107
  %1111 = vrot.lane.b32.xlu0 %v1109, 64
  %v1112 = vpop.permute.xlu0 %1111
  %1115 = vrot.lane.b32.xlu0 %v1048, 96
  %v1116 = vpop.permute.xlu0 %1115
  %v1118 = vsel %vm130, %v1112, %v1116
  %v1120 = vsel %vm201, %v1118, 0
  %1122 = vmatpush.msra.mxu0 0.0
  %1123 = vmatpush.msra.mxu0 0.0
  %1124 = vmatpush.msra.mxu0 0.0
  %1125 = vmatpush.msra.mxu0 0.0
  %1126 = vmatpush.msra.mxu0 0.0
  %1127 = vmatpush.msra.mxu0 0.0
  %1128 = vmatpush.msra.mxu0 0.0
  %1129 = vmatpush.msra.mxu0 0.0
  %1130 = vmatpush.msra.mxu0 %v48
  %1131 = vmatpush.msra.mxu0 %v47
  %1132 = vmatpush.msra.mxu0 %v46
  %1133 = vmatpush.msra.mxu0 %v45
  %1134 = vmatpush.msra.mxu0 %v44
  %1135 = vmatpush.msra.mxu0 %v43
  %1136 = vmatpush.msra.mxu0 %v42
  %1137 = vmatpush.msra.mxu0 %v41
  %1138 = vmatmul.f32.gmra.mxu0 %v1120
  %v1139 = vpop.f32.mrf.mxu0
  %v1140 = vadd.f32 %v199, %v1139
  %1141 = vdwg.mxu0
  %v1142 = vxor.u32 %v1140, 2147483648
  %v1143 = vmul.f32 %v1142, 1.442695
  %v1144 = vpow.pop %v1143
  %v1145 = vadd.f32 %v1144, 1.0
  %v1146 = vrcp.pop %v1145
  %v1147 = vmul.f32 %v1145, %v1146
  %v1148 = vsub.f32 1.0, %v1147
  %v1149 = vmul.f32 %v1146, %v1148
  %v1150 = vadd.f32 %v1146, %v1149
  %vm1151 = vweird.f32 %v1145
  %vm1152 = vweird.f32 %v1146
  %vm1153 = vmor %vm1151, %vm1152
  %v1154 = vsel %vm1153, %v1146, %v1150
  %v1155 = vand.u32 2147483647, %v1145
  %vm1156 = vcmp.eq.f32.partialorder %v1155, 8.507059e+37
  %v1157 = vand.u32 %v1145, 2147483648
  %v1158 = vor.u32 1.1754944e-38, %v1157
  %v1159 = vsel %vm1156, %v1158, %v1154
  %v1160 = vmul.f32 1.0, %v1159
  %v1161 = vtanh.pop %v1140
  %v1162 = vsel %vm129, %v1160, %v1161
  %v1163 = vmul.f32 %v1162, %v1042
  %1165 = vrot.lane.b32.xlu0 %v1162, 32
  %v1166 = vpop.permute.xlu0 %1165
  %v1168 = vmul.f32 %v1162, %v1166
  %1170 = vrot.lane.b32.xlu0 %v1168, 32
  %v1171 = vpop.permute.xlu0 %1170
  %v1173 = vadd.f32 %v1163, %v1171
  %v1174 = vtanh.pop %v1173
  %1176 = vrot.lane.b32.xlu0 %v1174, 32
  %v1177 = vpop.permute.xlu0 %1176
  %v1179 = vmul.f32 %v1162, %v1177
  %v1181 = vperm.slane %v33, 0
  %1184 = vrot.lane.b32.xlu0 %v1179, 64
  %v1185 = vpop.permute.xlu0 %1184
  %v1186 = vsel %vm130, %v1185, 0
  %1188 = vmatpush.msra.mxu0 0.0
  %1189 = vmatpush.msra.mxu0 0.0
  %1190 = vmatpush.msra.mxu0 0.0
  %1191 = vmatpush.msra.mxu0 0.0
  %1192 = vmatpush.msra.mxu0 0.0
  %1193 = vmatpush.msra.mxu0 0.0
  %1194 = vmatpush.msra.mxu0 0.0
  %1195 = vmatpush.msra.mxu0 0.0
  %1196 = vmatpush.msra.mxu0 0.0
  %1197 = vmatpush.msra.mxu0 0.0
  %1198 = vmatpush.msra.mxu0 0.0
  %1199 = vmatpush.msra.mxu0 0.0
  %1200 = vmatpush.msra.mxu0 %v32
  %1201 = vmatpush.msra.mxu0 %v31
  %1202 = vmatpush.msra.mxu0 %v30
  %1203 = vmatpush.msra.mxu0 %v29
  %1204 = vmatmul.f32.gmra.mxu0 %v1186
  %v1205 = vpop.f32.mrf.mxu0
  %v1206 = vadd.f32 %v1181, %v1205
  %1207 = vdwg.mxu0
  %vm1208 = vcmask 31744
  %1209 = vst.msk [vmem:[%s8] sm:$0xff] %vm1208, %v1206
  // Predicated region
  $region34: #{lstm_model_forward.1} parent=0 // pred_check
    _
  $region35: #{lstm_model_forward.1} parent=0 // pred_check_branch
    %1211 = sbr.rel (0) target = $region37
  $region36: #{lstm_model_forward.1} parent=0 // pred_region
    _
  $region37: #{lstm_model_forward.1} parent=0 // pred_fallthru
    _
  // Predicated region
  $region38: #{lstm_model_forward.1} parent=0 // pred_check
    _
  $region39: #{lstm_model_forward.1} parent=0 // pred_check_branch
    %1213 = sbr.rel (0) target = $region41
  $region40: #{lstm_model_forward.1} parent=0 // pred_region
    _
  $region41: #{lstm_model_forward.1} parent=0 // pred_fallthru
    _

</llo_original>
